<compile_context>
chip_gen: v6e
topology: v6e:2x2x1
jax: 0.10.0
libtpu: 0.0.40
codegen_flags: <defaults>
</compile_context>

<pallas_src>
import math

import jax
import jax.numpy as jnp
import numpy as np
from jax.experimental import pallas as pl
from jax.experimental.pallas import tpu as pltpu


def _gaussian_1d(window_size, sigma):
    # Matches gaussian() in the PyTorch module.
    g = [math.exp(-((x - window_size // 2) ** 2) / (2.0 * sigma ** 2))
         for x in range(window_size)]
    s = sum(g)
    return [v / s for v in g]


def _round_up(x, m):
    return ((x + m - 1) // m) * m


def _vmem_limits():
    """(vmem_limit_bytes for the compiler, tile budget for _pick_tnc)."""
    cap = 64 * 1024 * 1024  # conservative default (v7x per-TensorCore VMEM)
    try:
        info = pltpu.get_tpu_info()
        c = getattr(info, "vmem_capacity_bytes", None)
        if c:
            cap = int(c)
    except Exception:
        pass
    if cap >= 128 * 1024 * 1024:          # v5e / v6e: 128 MiB per TensorCore
        limit = 96 * 1024 * 1024
    else:                                 # v7x: 64 MiB per TensorCore
        limit = min(40 * 1024 * 1024, cap * 5 // 8)
    return limit, limit // 2


def _pick_tnc(nc, h, w, in_dtype_bytes, budget_bytes):
    """Largest divisor of nc whose (8,128)-padded VMEM footprint fits the
    budget; prefer >= 4 grid blocks (2 per core on megacore parts), then >= 2."""
    hp8 = _round_up(h, 8)
    wp = _round_up(w, 128)
    hp128 = _round_up(h, 128)
    f32 = 4

    def est(t):
        fields = 5 * t * hp8 * wp * f32                  # persistent fields scratch
        yw = 5 * t * hp8 * wp * f32                      # W-pass matmul output
        z = 5 * t * hp8 * wp * f32                       # H-pass matmul output
        ew = 8 * t * hp8 * wp * f32                      # elementwise temporaries
        ab = 2 * t * hp8 * wp * f32                      # in-kernel f32 casts
        inp = 2 * 2 * t * hp8 * wp * in_dtype_bytes      # double-buffered inputs
        bw = 2 * _round_up(w, 8) * wp * f32              # band_w (double-buffered)
        bh = 2 * 5 * t * hp8 * hp128 * f32               # band_h broadcast
        return int(1.3 * (fields + yw + z + ew + ab + inp + bw + bh))

    divisors = [t for t in range(1, nc + 1) if nc % t == 0]
    fitting = [t for t in divisors if est(t) <= budget_bytes]
    if not fitting:
        raise NotImplementedError(
            "SSIM Pallas kernel: a single (N*C) slice of H=%d, W=%d exceeds "
            "the VMEM budget (%d bytes); H tiling with a 2*pad halo is not "
            "implemented yet." % (h, w, budget_bytes))
    for min_blocks in (4, 2, 1):
        cands = [t for t in fitting if nc // t >= min_blocks]
        if cands:
            return max(cands)
    return max(fitting)


def _make_ssim_kernel(tnc, h, w, wp):
    nf = 5                      # number of stacked conv fields
    c1 = 0.01 ** 2
    c2 = 0.03 ** 2
    th = tnc * h

    def kernel(img1_ref, img2_ref, bw_ref, bh_ref, out_ref, fields_ref):
        a = img1_ref[...].astype(jnp.float32)            # (tnc, h, w)
        b = img2_ref[...].astype(jnp.float32)
        a2 = a.reshape(th, w)
        b2 = b.reshape(th, w)

        # Five depthwise-conv fields stacked along sublanes via direct slab
        # stores (no concatenate copy).  Every element is rewritten each grid
        # step, so no scratch initialization is needed (megacore-safe).
        fields_ref[0 * th:1 * th, :] = a2
        fields_ref[1 * th:2 * th, :] = b2
        fields_ref[2 * th:3 * th, :] = a2 * a2
        fields_ref[3 * th:4 * th, :] = b2 * b2
        fields_ref[4 * th:5 * th, :] = a2 * b2

        # W-axis Gaussian pass: ONE MXU matmul.  band_w encodes the zero
        # 'same' padding and lane-aligns the output width (multiple of 128).
        yw = jnp.dot(fields_ref[...], bw_ref[...],
                     preferred_element_type=jnp.float32)      # (5*th, wp)
        yw3 = yw.reshape(nf * tnc, h, wp)

        # H-axis Gaussian pass: batched MXU matmul against the banded (h, h)
        # Toeplitz matrix (zero 'same' padding built in).  Replaces the 11-tap
        # VPU loop and the ypad halo scratch entirely.
        z = jnp.einsum('bir,brw->biw', bh_ref[...], yw3,
                       preferred_element_type=jnp.float32)    # (5*tnc, h, wp)

        mu1 = z[0 * tnc:1 * tnc]
        mu2 = z[1 * tnc:2 * tnc]
        e11 = z[2 * tnc:3 * tnc]
        e22 = z[3 * tnc:4 * tnc]
        e12 = z[4 * tnc:5 * tnc]

        mu1_sq = mu1 * mu1
        mu2_sq = mu2 * mu2
        mu1_mu2 = mu1 * mu2
        sigma1_sq = e11 - mu1_sq
        sigma2_sq = e22 - mu2_sq
        sigma12 = e12 - mu1_mu2

        num = (2.0 * mu1_mu2 + c1) * (2.0 * sigma12 + c2)
        den = (mu1_sq + mu2_sq + c1) * (sigma1_sq + sigma2_sq + c2)
        # EUP approx reciprocal + one Newton step (~f32 accuracy, no divide).
        r = pl.reciprocal(den, approx=True)
        r = r * (2.0 - den * r)
        ssim_map = num * r                                    # (tnc, h, wp)

        # Lane-dense per-block partial column sums.  Columns >= w hold the
        # SSIM of the zero lane padding (== 1) and are dropped in the wrapper
        # before the final mean.
        t0 = jnp.sum(ssim_map, axis=0)                        # (h, wp)
        t1 = jnp.sum(t0, axis=0, keepdims=True)               # (1, wp)
        out_ref[...] = t1.reshape(1, 1, wp)

    return kernel


def ssim_pallas(img1, img2, window_size=11, size_average=True):
    """SSIM forward matching the PyTorch SSIM module (size_average=True)."""
    assert size_average, "module default size_average=True is implemented"
    n, c, h, w = img1.shape
    assert img2.shape == img1.shape
    nc = n * c
    pad = window_size // 2
    wp = _round_up(w, 128)                 # lane-aligned conv output width
    weights = _gaussian_1d(window_size, 1.5)

    vmem_limit, budget = _vmem_limits()
    in_bytes = jnp.dtype(img1.dtype).itemsize
    tnc = _pick_tnc(nc, h, w, in_bytes, budget)
    grid_blocks = nc // tnc

    # Banded Toeplitz matrices for both separable Gaussian passes; both encode
    # the zero 'same' padding of F.conv2d(padding=window_size//2).
    band_w = np.zeros((w, wp), np.float32)
    for j in range(w):
        for k in range(window_size):
            r = j + k - pad
            if 0 <= r < w:
                band_w[r, j] = weights[k]
    band_h = np.zeros((h, h), np.float32)
    for i in range(h):
        for k in range(window_size):
            r = i + k - pad
            if 0 <= r < h:
                band_h[i, r] = weights[k]
    band_h_b = np.broadcast_to(band_h, (5 * tnc, h, h)).copy()

    # Keep the original dtype through the DMA; the f32 cast happens in-kernel.
    a = img1.reshape(nc, h, w)
    b = img2.reshape(nc, h, w)

    kernel = _make_ssim_kernel(tnc, h, w, wp)
    partials = pl.pallas_call(
        kernel,
        out_shape=jax.ShapeDtypeStruct((grid_blocks, 1, wp), jnp.float32),
        grid=(grid_blocks,),
        in_specs=[
            pl.BlockSpec((tnc, h, w), lambda i: (i, 0, 0)),
            pl.BlockSpec((tnc, h, w), lambda i: (i, 0, 0)),
            pl.BlockSpec((w, wp), lambda i: (0, 0)),
            pl.BlockSpec((5 * tnc, h, h), lambda i: (0, 0, 0)),
        ],
        out_specs=pl.BlockSpec((1, 1, wp), lambda i: (i, 0, 0)),
        scratch_shapes=[pltpu.VMEM((5 * tnc * h, w), jnp.float32)],
        compiler_params=pltpu.CompilerParams(
            dimension_semantics=("parallel",),
            vmem_limit_bytes=vmem_limit),
    )(a, b, jnp.asarray(band_w), jnp.asarray(band_h_b))

    total = jnp.sum(partials[:, 0, :w])    # drop lane-padding columns
    return total / jnp.float32(nc * h * w)


def _ssim_numpy_ref(img1, img2, window_size=11):
    """Pure numpy reference replicating F.conv2d(groups=C, padding=ws//2)."""
    n, c, h, w = img1.shape
    pad = window_size // 2
    g = np.asarray(_gaussian_1d(window_size, 1.5), dtype=np.float64)
    win2d = np.outer(g, g)

    def dconv(x):  # x: (n, c, h, w)
        xp = np.pad(x, ((0, 0), (0, 0), (pad, pad), (pad, pad)))
        out = np.zeros_like(x, dtype=np.float64)
        for dy in range(window_size):
            for dx in range(window_size):
                out += win2d[dy, dx] * xp[:, :, dy:dy + h, dx:dx + w]
        return out

    a = img1.astype(np.float64)
    b = img2.astype(np.float64)
    mu1, mu2 = dconv(a), dconv(b)
    s11 = dconv(a * a) - mu1 * mu1
    s22 = dconv(b * b) - mu2 * mu2
    s12 = dconv(a * b) - mu1 * mu2
    c1, c2 = 0.01 ** 2, 0.03 ** 2
    ssim_map = ((2 * mu1 * mu2 + c1) * (2 * s12 + c2)
                / ((mu1 * mu1 + mu2 * mu2 + c1) * (s11 + s22 + c2)))
    return ssim_map.mean()


if __name__ == "__main__":
    key = jax.random.PRNGKey(0)
    k1, k2 = jax.random.split(key)
    shape = (2, 4, 16, 16)  # N, C, H, W
    img1 = jax.random.uniform(k1, shape, dtype=jnp.float32)
    img2 = jax.random.uniform(k2, shape, dtype=jnp.float32)

    out = ssim_pallas(img1, img2)
    out = jax.block_until_ready(out)

    ref = _ssim_numpy_ref(np.asarray(img1), np.asarray(img2))
    np.testing.assert_allclose(float(out), float(ref), rtol=1e-4, atol=1e-5)
    print("KERNEL_OK")
</pallas_src>

<mosaic_0001>
module attributes {stable_mosaic.version = 11 : i64} {
  func.func @kernel(%arg0: i32, %arg1: memref<2x16x16xf32, #tpu.memory_space<vmem>>, %arg2: memref<2x16x16xf32, #tpu.memory_space<vmem>>, %arg3: memref<16x128xf32, #tpu.memory_space<vmem>>, %arg4: memref<10x16x16xf32, #tpu.memory_space<vmem>>, %arg5: memref<1x1x128xf32, #tpu.memory_space<vmem>>, %arg6: memref<160x16xf32, #tpu.memory_space<vmem>>) attributes {dimension_semantics = [#tpu.dimension_semantics<parallel>], iteration_bounds = array<i64: 4>, scalar_prefetch = 0 : i64, scratch_operands = 1 : i64, tpu.core_type = #tpu.core_type<tc>, window_params = [{transform_indices = @transform_0, window_bounds = array<i64: 2, 16, 16>}, {transform_indices = @transform_1, window_bounds = array<i64: 2, 16, 16>}, {pipeline_mode = #tpu.pipeline_mode<synchronous>, transform_indices = @transform_2, window_bounds = array<i64: 16, 128>}, {pipeline_mode = #tpu.pipeline_mode<synchronous>, transform_indices = @transform_3, window_bounds = array<i64: 10, 16, 16>}, {transform_indices = @transform_4, window_bounds = array<i64: 1, 1, 128>}]} {
    %c0 = arith.constant 0 : index
    %c0_0 = arith.constant 0 : index
    %c0_1 = arith.constant 0 : index
    %0 = vector.load %arg1[%c0, %c0_0, %c0_1] : memref<2x16x16xf32, #tpu.memory_space<vmem>>, vector<2x16x16xf32>
    %c0_2 = arith.constant 0 : index
    %c0_3 = arith.constant 0 : index
    %c0_4 = arith.constant 0 : index
    %1 = vector.load %arg2[%c0_2, %c0_3, %c0_4] : memref<2x16x16xf32, #tpu.memory_space<vmem>>, vector<2x16x16xf32>
    %2 = vector.shape_cast %0 : vector<2x16x16xf32> to vector<32x16xf32>
    %3 = vector.shape_cast %1 : vector<2x16x16xf32> to vector<32x16xf32>
    %c0_5 = arith.constant 0 : index
    %c0_6 = arith.constant 0 : index
    %4 = vector.load %arg6[%c0_5, %c0_6] : memref<160x16xf32, #tpu.memory_space<vmem>>, vector<32x16xf32>
    tpu.vector_store %arg6[%c0_5, %c0_6], %2 {strides = array<i32>} : memref<160x16xf32, #tpu.memory_space<vmem>>, vector<32x16xf32>,
    %c32 = arith.constant 32 : index
    %c0_7 = arith.constant 0 : index
    %5 = vector.load %arg6[%c32, %c0_7] : memref<160x16xf32, #tpu.memory_space<vmem>>, vector<32x16xf32>
    tpu.vector_store %arg6[%c32, %c0_7], %3 {strides = array<i32>} : memref<160x16xf32, #tpu.memory_space<vmem>>, vector<32x16xf32>,
    %6 = arith.mulf %2, %2 : vector<32x16xf32>
    %c64 = arith.constant 64 : index
    %c0_8 = arith.constant 0 : index
    %7 = vector.load %arg6[%c64, %c0_8] : memref<160x16xf32, #tpu.memory_space<vmem>>, vector<32x16xf32>
    tpu.vector_store %arg6[%c64, %c0_8], %6 {strides = array<i32>} : memref<160x16xf32, #tpu.memory_space<vmem>>, vector<32x16xf32>,
    %8 = arith.mulf %3, %3 : vector<32x16xf32>
    %c96 = arith.constant 96 : index
    %c0_9 = arith.constant 0 : index
    %9 = vector.load %arg6[%c96, %c0_9] : memref<160x16xf32, #tpu.memory_space<vmem>>, vector<32x16xf32>
    tpu.vector_store %arg6[%c96, %c0_9], %8 {strides = array<i32>} : memref<160x16xf32, #tpu.memory_space<vmem>>, vector<32x16xf32>,
    %10 = arith.mulf %2, %3 : vector<32x16xf32>
    %c128 = arith.constant 128 : index
    %c0_10 = arith.constant 0 : index
    %11 = vector.load %arg6[%c128, %c0_10] : memref<160x16xf32, #tpu.memory_space<vmem>>, vector<32x16xf32>
    tpu.vector_store %arg6[%c128, %c0_10], %10 {strides = array<i32>} : memref<160x16xf32, #tpu.memory_space<vmem>>, vector<32x16xf32>,
    %c0_11 = arith.constant 0 : index
    %c0_12 = arith.constant 0 : index
    %12 = vector.load %arg6[%c0_11, %c0_12] : memref<160x16xf32, #tpu.memory_space<vmem>>, vector<160x16xf32>
    %c0_13 = arith.constant 0 : index
    %c0_14 = arith.constant 0 : index
    %13 = vector.load %arg3[%c0_13, %c0_14] : memref<16x128xf32, #tpu.memory_space<vmem>>, vector<16x128xf32>
    %cst = arith.constant dense<0.000000e+00> : vector<160x128xf32>
    %14 = tpu.matmul %12, %13, %cst {dimension_numbers = #tpu.dot_dimension_numbers<[1], [0], [0], [1], [0, 0, 1, 1], [], []>} : vector<160x16xf32>, vector<16x128xf32>, vector<160x128xf32> -> vector<160x128xf32>
    %15 = vector.shape_cast %14 : vector<160x128xf32> to vector<10x16x128xf32>
    %c0_15 = arith.constant 0 : index
    %c0_16 = arith.constant 0 : index
    %c0_17 = arith.constant 0 : index
    %16 = vector.load %arg4[%c0_15, %c0_16, %c0_17] : memref<10x16x16xf32, #tpu.memory_space<vmem>>, vector<10x16x16xf32>
    "tpu.trace_start"() <{level = 10 : i32, message = "bir,brw->biw"}> : () -> ()
    %cst_18 = arith.constant dense<0.000000e+00> : vector<10x16x128xf32>
    %17 = tpu.matmul %16, %15, %cst_18 {dimension_numbers = #tpu.dot_dimension_numbers<[2], [1], [1], [2], [0, 0, 0, 1, 1, 2], [0], [0]>} : vector<10x16x16xf32>, vector<10x16x128xf32>, vector<10x16x128xf32> -> vector<10x16x128xf32>
    "tpu.trace_stop"() : () -> ()
    %18 = vector.extract_strided_slice %17 {offsets = [0, 0, 0], sizes = [2, 16, 128], strides = [1, 1, 1]} : vector<10x16x128xf32> to vector<2x16x128xf32>
    %19 = vector.extract_strided_slice %17 {offsets = [2, 0, 0], sizes = [2, 16, 128], strides = [1, 1, 1]} : vector<10x16x128xf32> to vector<2x16x128xf32>
    %20 = vector.extract_strided_slice %17 {offsets = [4, 0, 0], sizes = [2, 16, 128], strides = [1, 1, 1]} : vector<10x16x128xf32> to vector<2x16x128xf32>
    %21 = vector.extract_strided_slice %17 {offsets = [6, 0, 0], sizes = [2, 16, 128], strides = [1, 1, 1]} : vector<10x16x128xf32> to vector<2x16x128xf32>
    %22 = vector.extract_strided_slice %17 {offsets = [8, 0, 0], sizes = [2, 16, 128], strides = [1, 1, 1]} : vector<10x16x128xf32> to vector<2x16x128xf32>
    %23 = arith.mulf %18, %18 : vector<2x16x128xf32>
    %24 = arith.mulf %19, %19 : vector<2x16x128xf32>
    %25 = arith.mulf %18, %19 : vector<2x16x128xf32>
    %26 = arith.subf %20, %23 : vector<2x16x128xf32>
    %27 = arith.subf %21, %24 : vector<2x16x128xf32>
    %28 = arith.subf %22, %25 : vector<2x16x128xf32>
    %cst_19 = arith.constant 2.000000e+00 : f32
    %29 = vector.broadcast %cst_19 : f32 to vector<2x16x128xf32>
    %30 = arith.mulf %29, %25 : vector<2x16x128xf32>
    %cst_20 = arith.constant 9.99999974E-5 : f32
    %31 = vector.broadcast %cst_20 : f32 to vector<2x16x128xf32>
    %32 = arith.addf %30, %31 : vector<2x16x128xf32>
    %cst_21 = arith.constant 2.000000e+00 : f32
    %33 = vector.broadcast %cst_21 : f32 to vector<2x16x128xf32>
    %34 = arith.mulf %33, %28 : vector<2x16x128xf32>
    %cst_22 = arith.constant 8.99999984E-4 : f32
    %35 = vector.broadcast %cst_22 : f32 to vector<2x16x128xf32>
    %36 = arith.addf %34, %35 : vector<2x16x128xf32>
    %37 = arith.mulf %32, %36 : vector<2x16x128xf32>
    %38 = arith.addf %23, %24 : vector<2x16x128xf32>
    %cst_23 = arith.constant 9.99999974E-5 : f32
    %39 = vector.broadcast %cst_23 : f32 to vector<2x16x128xf32>
    %40 = arith.addf %38, %39 : vector<2x16x128xf32>
    %41 = arith.addf %26, %27 : vector<2x16x128xf32>
    %cst_24 = arith.constant 8.99999984E-4 : f32
    %42 = vector.broadcast %cst_24 : f32 to vector<2x16x128xf32>
    %43 = arith.addf %41, %42 : vector<2x16x128xf32>
    %44 = arith.mulf %40, %43 : vector<2x16x128xf32>
    %45 = tpu.reciprocal %44 {approx = true} : vector<2x16x128xf32> -> vector<2x16x128xf32>
    %46 = arith.mulf %44, %45 : vector<2x16x128xf32>
    %cst_25 = arith.constant 2.000000e+00 : f32
    %47 = vector.broadcast %cst_25 : f32 to vector<2x16x128xf32>
    %48 = arith.subf %47, %46 : vector<2x16x128xf32>
    %49 = arith.mulf %45, %48 : vector<2x16x128xf32>
    %50 = arith.mulf %37, %49 : vector<2x16x128xf32>
    %cst_26 = arith.constant dense<0.000000e+00> : vector<16x128xf32>
    %51 = vector.multi_reduction <add>, %50, %cst_26 [0] : vector<2x16x128xf32> to vector<16x128xf32>
    %cst_27 = arith.constant dense<0.000000e+00> : vector<128xf32>
    %52 = vector.multi_reduction <add>, %51, %cst_27 [0] : vector<16x128xf32> to vector<128xf32>
    %53 = vector.shape_cast %52 : vector<128xf32> to vector<1x128xf32>
    %54 = vector.shape_cast %53 : vector<1x128xf32> to vector<1x1x128xf32>
    %c0_28 = arith.constant 0 : index
    %c0_29 = arith.constant 0 : index
    %c0_30 = arith.constant 0 : index
    %55 = vector.load %arg5[%c0_28, %c0_29, %c0_30] : memref<1x1x128xf32, #tpu.memory_space<vmem>>, vector<1x1x128xf32>
    tpu.vector_store %arg5[%c0_28, %c0_29, %c0_30], %54 {strides = array<i32>} : memref<1x1x128xf32, #tpu.memory_space<vmem>>, vector<1x1x128xf32>,
    return
  }
  func.func @transform_0(%arg0: i32) -> (i32, i32, i32) {
    %c0_i32 = arith.constant 0 : i32
    %c0_i32_0 = arith.constant 0 : i32
    %c0_i32_1 = arith.constant 0 : i32
    return %arg0, %c0_i32, %c0_i32_0 : i32, i32, i32
  }
  func.func @transform_1(%arg0: i32) -> (i32, i32, i32) {
    %c0_i32 = arith.constant 0 : i32
    %c0_i32_0 = arith.constant 0 : i32
    %c0_i32_1 = arith.constant 0 : i32
    return %arg0, %c0_i32, %c0_i32_0 : i32, i32, i32
  }
  func.func @transform_2(%arg0: i32) -> (i32, i32) {
    %c0_i32 = arith.constant 0 : i32
    %c0_i32_0 = arith.constant 0 : i32
    %c0_i32_1 = arith.constant 0 : i32
    return %c0_i32, %c0_i32_0 : i32, i32
  }
  func.func @transform_3(%arg0: i32) -> (i32, i32, i32) {
    %c0_i32 = arith.constant 0 : i32
    %c0_i32_0 = arith.constant 0 : i32
    %c0_i32_1 = arith.constant 0 : i32
    %c0_i32_2 = arith.constant 0 : i32
    return %c0_i32, %c0_i32_0, %c0_i32_1 : i32, i32, i32
  }
  func.func @transform_4(%arg0: i32) -> (i32, i32, i32) {
    %c0_i32 = arith.constant 0 : i32
    %c0_i32_0 = arith.constant 0 : i32
    %c0_i32_1 = arith.constant 0 : i32
    return %arg0, %c0_i32, %c0_i32_0 : i32, i32, i32
  }
}

</mosaic_0001>

<llo_original>
// kernel: tpu_custom_call.1
$region0: #{tpu_custom_call.1}
  #allocation0 [shape = 'u32[]', space=smem, size = 0x4, offset = 0x4, fixed_abs, tag = 'smem constant byte address 0x4 - core index']
  #allocation1 [shape = 'u32[144,128]{1,0:T(1,128)}', space=vmem, size = 0x12000, scoped, tag = 'internal scratch']
  #allocation2 [shape = 'f32[160,16]{1,0:T(8,128)}', space=vmem, size = 0x14000, scoped, tag = 'scratch operand']
  %s0 = inlined_call_operand.hbm [shape: f32[8,16,16], index: 0, kind: input, shape index: {}]
  %s1 = inlined_call_operand.hbm [shape: f32[8,16,16], index: 1, kind: input, shape index: {}]
  %s2 = inlined_call_operand.hbm [shape: f32[16,128], index: 2, kind: input, shape index: {}]
  %s3 = inlined_call_operand.hbm [shape: f32[10,16,16], index: 3, kind: input, shape index: {}]
  %s4 = inlined_call_operand.hbm [shape: f32[4,1,128], index: 4, kind: output, shape index: {}]
  %s5 = sld [smem:[#allocation0]]
  $region65: #{tpu_custom_call.1} parent=0
    _
  %s7 = ssub.s32 1, %s5
  %s8 = scalar_select 0, %s7, %s5
  $region1: #{tpu_custom_call.1} parent=0
    #allocation3 [shape = 'u8[32768]{0}', space=vmem, size = 0x8000, scoped, tag = 'input window, operand 0']
    #allocation4 [shape = 's32[2]{0}', space=sflag, size = 0x8, scoped, tag = 'scoped memory for tpu_custom_call.1']
    #allocation5 [shape = 's32[2]{0}', space=sflag, size = 0x8, scoped, tag = 'scoped memory for tpu_custom_call.1']
    #allocation6 [shape = 'u8[32768]{0}', space=vmem, size = 0x8000, scoped, tag = 'input window, operand 1']
    #allocation7 [shape = 's32[2]{0}', space=sflag, size = 0x8, scoped, tag = 'scoped memory for tpu_custom_call.1']
    #allocation8 [shape = 'u8[8192]{0}', space=vmem, size = 0x2000, scoped, tag = 'input window, operand 2, single buffered']
    #allocation9 [shape = 'u8[81920]{0}', space=vmem, size = 0x14000, scoped, tag = 'input window, operand 3, single buffered']
    #allocation10 [shape = 's32[1]{0}', space=sflag, size = 0x4, scoped, tag = 'scoped memory for tpu_custom_call.1']
    #allocation11 [shape = 'u8[1024]{0}', space=vmem, size = 0x400, scoped, tag = 'output window, operand 0']
    %9 = vsyncpa [#allocation4], 0
    %s10 = scalar_lea.sflag [#allocation4], 1
    %11 = vsyncpa %s10, 0
    %12 = vsyncpa [#allocation7], 0
    %s13 = scalar_lea.sflag [#allocation7], 1
    %14 = vsyncpa %s13, 0
    %15 = vsyncpa [#allocation10], 0
    %16 = vsyncpa [#allocation5], 0
    %s17 = scalar_lea.sflag [#allocation5], 1
    %18 = vsyncpa %s17, 0
    loop: start=0, step=1, limit=6
    $region2: #{tpu_custom_call.1} parent=1 // loop_pre_header
      _
    $region3: #{tpu_custom_call.1} parent=1 // loop_header
      %s20 = sphi 0, %s24
      %p21 = scmp.ge.s32.totalorder %s20, 6
      %s30 = sphi 0, %s32
      %s33 = sphi 0, %s30
      %s34 = sphi 0, %s33
      %s50 = sphi 0, %s34
      %s56 = sphi 0, %s58
      %s59 = sphi 0, %s56
      %s60 = sphi 0, %s59
      %s76 = sphi 0, %s60
      %s80 = sphi 0, %s80
      %s82 = sphi 0, %s80
      %s83 = sphi 0, %s82
      %s97 = sphi 0, %s83
      %s101 = sphi 0, %s101
      %s103 = sphi 0, %s101
      %s104 = sphi 0, %s103
      %s118 = sphi 0, %s104
      %s124 = sphi 0, %s126
      %s127 = sphi 0, %s124
      %s128 = sphi 0, %s127
      %s144 = sphi 0, %s128
    $region4: #{tpu_custom_call.1} parent=1 // loop_header_branch
      %23 = sbr.rel (%p21) target = $region8
    $region5: #{tpu_custom_call.1} parent=1 // loop_body
      %s25 = ssub.s32 %s20, 1
      %s26 = ssub.s32 %s20, 2
      %s27 = sadd.s32 %s20, 1
      %s28 = ssub.s32 %s20, %s27
      %p29 = scmp.eq.s32.totalorder %s28, 0
      %s31 = sadd.s32 %s30, 1
      %s32 = scalar_select %p29, %s30, %s31
      %p35 = pneg %p29
      %p36 = scmp.eq.s32.totalorder %s20, 3
      %p37 = por %p35, %p36
      %p38 = scmp.ne.s32.totalorder %s30, %s33
      %p39 = scmp.eq.s32.totalorder %s20, 0
      %p40 = por %p38, %p39
      %p41 = scmp.ne.s32.totalorder %s30, %s33
      %p42 = scmp.eq.s32.totalorder %s25, 3
      %p43 = por %p41, %p42
      %p44 = scmp.ne.s32.totalorder %s33, %s34
      %p45 = scmp.eq.s32.totalorder %s25, 0
      %p46 = por %p44, %p45
      %p47 = scmp.ne.s32.totalorder %s33, %s34
      %p48 = scmp.eq.s32.totalorder %s26, 3
      %p49 = por %p47, %p48
      %p51 = scmp.ne.s32.totalorder %s34, %s50
      %p52 = scmp.eq.s32.totalorder %s26, 0
      %p53 = por %p51, %p52
      %s54 = ssub.s32 %s20, %s27
      %p55 = scmp.eq.s32.totalorder %s54, 0
      %s57 = sadd.s32 %s56, 1
      %s58 = scalar_select %p55, %s56, %s57
      %p61 = pneg %p55
      %p62 = scmp.eq.s32.totalorder %s20, 3
      %p63 = por %p61, %p62
      %p64 = scmp.ne.s32.totalorder %s56, %s59
      %p65 = scmp.eq.s32.totalorder %s20, 0
      %p66 = por %p64, %p65
      %p67 = scmp.ne.s32.totalorder %s56, %s59
      %p68 = scmp.eq.s32.totalorder %s25, 3
      %p69 = por %p67, %p68
      %p70 = scmp.ne.s32.totalorder %s59, %s60
      %p71 = scmp.eq.s32.totalorder %s25, 0
      %p72 = por %p70, %p71
      %p73 = scmp.ne.s32.totalorder %s59, %s60
      %p74 = scmp.eq.s32.totalorder %s26, 3
      %p75 = por %p73, %p74
      %p77 = scmp.ne.s32.totalorder %s60, %s76
      %p78 = scmp.eq.s32.totalorder %s26, 0
      %p79 = por %p77, %p78
      %s81 = sadd.s32 %s80, 1
      %p84 = scmp.eq.s32.totalorder %s20, 3
      %p85 = scmp.ne.s32.totalorder %s80, %s82
      %p86 = scmp.eq.s32.totalorder %s20, 0
      %p87 = por %p85, %p86
      %p88 = scmp.ne.s32.totalorder %s80, %s82
      %p89 = scmp.eq.s32.totalorder %s25, 3
      %p90 = por %p88, %p89
      %p91 = scmp.ne.s32.totalorder %s82, %s83
      %p92 = scmp.eq.s32.totalorder %s25, 0
      %p93 = por %p91, %p92
      %p94 = scmp.ne.s32.totalorder %s82, %s83
      %p95 = scmp.eq.s32.totalorder %s26, 3
      %p96 = por %p94, %p95
      %p98 = scmp.ne.s32.totalorder %s83, %s97
      %p99 = scmp.eq.s32.totalorder %s26, 0
      %p100 = por %p98, %p99
      %s102 = sadd.s32 %s101, 1
      %p105 = scmp.eq.s32.totalorder %s20, 3
      %p106 = scmp.ne.s32.totalorder %s101, %s103
      %p107 = scmp.eq.s32.totalorder %s20, 0
      %p108 = por %p106, %p107
      %p109 = scmp.ne.s32.totalorder %s101, %s103
      %p110 = scmp.eq.s32.totalorder %s25, 3
      %p111 = por %p109, %p110
      %p112 = scmp.ne.s32.totalorder %s103, %s104
      %p113 = scmp.eq.s32.totalorder %s25, 0
      %p114 = por %p112, %p113
      %p115 = scmp.ne.s32.totalorder %s103, %s104
      %p116 = scmp.eq.s32.totalorder %s26, 3
      %p117 = por %p115, %p116
      %p119 = scmp.ne.s32.totalorder %s104, %s118
      %p120 = scmp.eq.s32.totalorder %s26, 0
      %p121 = por %p119, %p120
      %s122 = ssub.s32 %s20, %s27
      %p123 = scmp.eq.s32.totalorder %s122, 0
      %s125 = sadd.s32 %s124, 1
      %s126 = scalar_select %p123, %s124, %s125
      %p129 = pneg %p123
      %p130 = scmp.eq.s32.totalorder %s20, 3
      %p131 = por %p129, %p130
      %p132 = scmp.ne.s32.totalorder %s124, %s127
      %p133 = scmp.eq.s32.totalorder %s20, 0
      %p134 = por %p132, %p133
      %p135 = scmp.ne.s32.totalorder %s124, %s127
      %p136 = scmp.eq.s32.totalorder %s25, 3
      %p137 = por %p135, %p136
      %p138 = scmp.ne.s32.totalorder %s127, %s128
      %p139 = scmp.eq.s32.totalorder %s25, 0
      %p140 = por %p138, %p139
      %p141 = scmp.ne.s32.totalorder %s127, %s128
      %p142 = scmp.eq.s32.totalorder %s26, 3
      %p143 = por %p141, %p142
      %p145 = scmp.ne.s32.totalorder %s128, %s144
      %p146 = scmp.eq.s32.totalorder %s26, 0
      %p147 = por %p145, %p146
      %p148 = scmp.le.s32.totalorder 1, %s20
      %p149 = scmp.lt.s32.totalorder %s20, 5
      %p150 = pnand %p148, %p149
      %p151 = pneg %p150
      // Predicated region
      $region9: #{tpu_custom_call.1} parent=5 // pred_check
        _
      $region10: #{tpu_custom_call.1} parent=5 // pred_check_branch
        %153 = sbr.rel (%p150) target = $region12
      $region11: #{tpu_custom_call.1} parent=5 // pred_region
        %s154 = ssub.s32 %s20, 1
        // Predicated region
        $region13: #{tpu_custom_call.1} parent=11 // pred_check
          %p155 = pneg %p93
        $region14: #{tpu_custom_call.1} parent=11 // pred_check_branch
          %157 = sbr.rel (%p155) target = $region16
        $region15: #{tpu_custom_call.1} parent=11 // pred_region
          %s159 = ssub.s32 256, 256
          %160 = vsyncadd [#allocation7], %s159
          %s161 = sshll.u32 [#allocation8], 4
          %s162 = int_to_ptr.vmem [resolvable:$true] %s161
          %167 = dma.hbm_to_vmem [thread:$0]  %s2, 256, %s162, [#allocation7], 128, 128, 8
        $region16: #{tpu_custom_call.1} parent=11 // pred_fallthru
          _
        // Predicated region
        $region17: #{tpu_custom_call.1} parent=11 // pred_check
          %p168 = pneg %p114
        $region18: #{tpu_custom_call.1} parent=11 // pred_check_branch
          %170 = sbr.rel (%p168) target = $region20
        $region19: #{tpu_custom_call.1} parent=11 // pred_region
          %s172 = ssub.s32 2560, 2560
          %173 = vsyncadd [#allocation10], %s172
          %s174 = sshll.u32 [#allocation9], 4
          %s175 = int_to_ptr.vmem [resolvable:$true] %s174
          %180 = dma.hbm_to_vmem [thread:$0]  %s3, 2560, %s175, [#allocation10], 128, 128, 8
        $region20: #{tpu_custom_call.1} parent=11 // pred_fallthru
          _
      $region12: #{tpu_custom_call.1} parent=5 // pred_fallthru
        _
      %p181 = scmp.lt.s32.totalorder %s20, 4
      // Predicated region
      $region21: #{tpu_custom_call.1} parent=5 // pred_check
        %p182 = pneg %p181
      $region22: #{tpu_custom_call.1} parent=5 // pred_check_branch
        %184 = sbr.rel (%p182) target = $region24
      $region23: #{tpu_custom_call.1} parent=5 // pred_region
        // Predicated region
        $region25: #{tpu_custom_call.1} parent=23 // pred_check
          %p185 = pneg %p40
        $region26: #{tpu_custom_call.1} parent=23 // pred_check_branch
          %187 = sbr.rel (%p185) target = $region28
        $region27: #{tpu_custom_call.1} parent=23 // pred_region
          %s188 = sand.u32 %s30, 1
          %s189 = scalar_lea.sflag [#allocation4], %s188
          %s190 = sand.u32 %s30, 1
          %s191 = smul.addr %s190, 32
          %s192 = scalar_lea.vmem [#allocation3], %s191
          %s193 = smul.u32 2, %s20
          %s195 = ssub.s32 512, 512
          %196 = vsyncadd %s189, %s195
          %s197 = smul.addr %s193, 2
          %s198 = smul.addr %s197, 128
          %s199 = scalar_lea.hbm %s0, %s198
          %s200 = sshll.u32 %s192, 4
          %s201 = int_to_ptr.vmem [resolvable:$true] %s200
          %206 = dma.hbm_to_vmem [thread:$0]  %s199, 512, %s201, %s189, 128, 128, 8
        $region28: #{tpu_custom_call.1} parent=23 // pred_fallthru
          _
        // Predicated region
        $region29: #{tpu_custom_call.1} parent=23 // pred_check
          %p207 = pneg %p66
        $region30: #{tpu_custom_call.1} parent=23 // pred_check_branch
          %209 = sbr.rel (%p207) target = $region32
        $region31: #{tpu_custom_call.1} parent=23 // pred_region
          %s210 = sand.u32 %s20, 1
          %s211 = scalar_lea.sflag [#allocation7], %s210
          %s212 = sand.u32 %s56, 1
          %s213 = smul.addr %s212, 32
          %s214 = scalar_lea.vmem [#allocation6], %s213
          %s215 = smul.u32 2, %s20
          %s217 = ssub.s32 512, 512
          %218 = vsyncadd %s211, %s217
          %s219 = smul.addr %s215, 2
          %s220 = smul.addr %s219, 128
          %s221 = scalar_lea.hbm %s1, %s220
          %s222 = sshll.u32 %s214, 4
          %s223 = int_to_ptr.vmem [resolvable:$true] %s222
          %228 = dma.hbm_to_vmem [thread:$0]  %s221, 512, %s223, %s211, 128, 128, 8
        $region32: #{tpu_custom_call.1} parent=23 // pred_fallthru
          _
      $region24: #{tpu_custom_call.1} parent=5 // pred_fallthru
        _
      %p229 = scmp.le.s32.totalorder 1, %s20
      %p230 = scmp.lt.s32.totalorder %s20, 5
      %p231 = pnand %p229, %p230
      %p232 = pneg %p231
      // Predicated region
      $region33: #{tpu_custom_call.1} parent=5 // pred_check
        _
      $region34: #{tpu_custom_call.1} parent=5 // pred_check_branch
        %234 = sbr.rel (%p231) target = $region36
      $region35: #{tpu_custom_call.1} parent=5 // pred_region
        %s235 = ssub.s32 %s20, 1
        %s236 = sand.u32 %s33, 1
        %s237 = scalar_lea.sflag [#allocation4], %s236
        %s238 = sand.u32 %s33, 1
        %s239 = smul.addr %s238, 32
        %s240 = scalar_lea.vmem [#allocation3], %s239
        // Predicated region
        $region37: #{tpu_custom_call.1} parent=35 // pred_check
          %p241 = pneg %p46
        $region38: #{tpu_custom_call.1} parent=35 // pred_check_branch
          %243 = sbr.rel (%p241) target = $region40
        $region39: #{tpu_custom_call.1} parent=35 // pred_region
          %244 = dma.done %s237, 512
        $region40: #{tpu_custom_call.1} parent=35 // pred_fallthru
          _
        %s245 = sand.u32 %s25, 1
        %s246 = scalar_lea.sflag [#allocation7], %s245
        %s247 = sand.u32 %s59, 1
        %s248 = smul.addr %s247, 32
        %s249 = scalar_lea.vmem [#allocation6], %s248
        // Predicated region
        $region41: #{tpu_custom_call.1} parent=35 // pred_check
          %p250 = pneg %p72
        $region42: #{tpu_custom_call.1} parent=35 // pred_check_branch
          %252 = sbr.rel (%p250) target = $region44
        $region43: #{tpu_custom_call.1} parent=35 // pred_region
          %253 = dma.done %s246, 512
        $region44: #{tpu_custom_call.1} parent=35 // pred_fallthru
          _
        // Predicated region
        $region45: #{tpu_custom_call.1} parent=35 // pred_check
          %p254 = pneg %p93
        $region46: #{tpu_custom_call.1} parent=35 // pred_check_branch
          %256 = sbr.rel (%p254) target = $region48
        $region47: #{tpu_custom_call.1} parent=35 // pred_region
          %257 = dma.done [#allocation7], 256
        $region48: #{tpu_custom_call.1} parent=35 // pred_fallthru
          _
        // Predicated region
        $region49: #{tpu_custom_call.1} parent=35 // pred_check
          %p258 = pneg %p114
        $region50: #{tpu_custom_call.1} parent=35 // pred_check_branch
          %260 = sbr.rel (%p258) target = $region52
        $region51: #{tpu_custom_call.1} parent=35 // pred_region
          %261 = dma.done [#allocation10], 2560
        $region52: #{tpu_custom_call.1} parent=35 // pred_fallthru
          _
        %s262 = sand.u32 %s33, 1
        %s263 = scalar_lea.sflag [#allocation4], %s262
        %s264 = sand.u32 %s33, 1
        %s265 = smul.addr %s264, 32
        %s266 = scalar_lea.vmem [#allocation3], %s265
        %p267 = pneg %p46
        %p268 = pneg %p43
        %s269 = sand.u32 %s25, 1
        %s270 = scalar_lea.sflag [#allocation7], %s269
        %s271 = sand.u32 %s59, 1
        %s272 = smul.addr %s271, 32
        %s273 = scalar_lea.vmem [#allocation6], %s272
        %p274 = pneg %p72
        %p275 = pneg %p69
        %p276 = pneg %p93
        %p277 = pneg %p90
        %p278 = pneg %p114
        %p279 = pneg %p111
        %p280 = pneg %p140
        %p281 = pneg %p137
        %s282 = sand.u32 %s127, 1
        %s283 = scalar_lea.sflag [#allocation5], %s282
        %s284 = sand.u32 %s127, 1
        %s285 = scalar_lea.vmem [#allocation11], %s284
        %s286 = smul.u32 2, %s25
        %s287 = smul.u32 2, %s25
        %v288 = vld [vmem:[%s240] sm:$0xff]
        %v289 = vld [vmem:[%s240 + $0x8] sm:$0xff]
        %v290 = vld [vmem:[%s240 + $0x10] sm:$0xff]
        %v291 = vld [vmem:[%s240 + $0x18] sm:$0xff]
        %v292 = vld [vmem:[%s249] sm:$0xff]
        %v293 = vld [vmem:[%s249 + $0x8] sm:$0xff]
        %v294 = vld [vmem:[%s249 + $0x10] sm:$0xff]
        %v295 = vld [vmem:[%s249 + $0x18] sm:$0xff]
        %vm296 = vcmask 130048
        %297 = vst.msk [vmem:[#allocation2] sm:$0xff] %vm296, %v288
        %298 = vst.msk [vmem:[#allocation2 + $0x8] sm:$0xff] %vm296, %v289
        %299 = vst.msk [vmem:[#allocation2 + $0x10] sm:$0xff] %vm296, %v290
        %300 = vst.msk [vmem:[#allocation2 + $0x18] sm:$0xff] %vm296, %v291
        %301 = vst.msk [vmem:[#allocation2 + $0x20] sm:$0xff] %vm296, %v292
        %302 = vst.msk [vmem:[#allocation2 + $0x28] sm:$0xff] %vm296, %v293
        %303 = vst.msk [vmem:[#allocation2 + $0x30] sm:$0xff] %vm296, %v294
        %304 = vst.msk [vmem:[#allocation2 + $0x38] sm:$0xff] %vm296, %v295
        %v305 = vmul.f32 %v288, %v288
        %v306 = vmul.f32 %v289, %v289
        %v307 = vmul.f32 %v290, %v290
        %v308 = vmul.f32 %v291, %v291
        %309 = vst.msk [vmem:[#allocation2 + $0x40] sm:$0xff] %vm296, %v305
        %310 = vst.msk [vmem:[#allocation2 + $0x48] sm:$0xff] %vm296, %v306
        %311 = vst.msk [vmem:[#allocation2 + $0x50] sm:$0xff] %vm296, %v307
        %312 = vst.msk [vmem:[#allocation2 + $0x58] sm:$0xff] %vm296, %v308
        %v313 = vmul.f32 %v292, %v292
        %v314 = vmul.f32 %v293, %v293
        %v315 = vmul.f32 %v294, %v294
        %v316 = vmul.f32 %v295, %v295
        %317 = vst.msk [vmem:[#allocation2 + $0x60] sm:$0xff] %vm296, %v313
        %318 = vst.msk [vmem:[#allocation2 + $0x68] sm:$0xff] %vm296, %v314
        %319 = vst.msk [vmem:[#allocation2 + $0x70] sm:$0xff] %vm296, %v315
        %320 = vst.msk [vmem:[#allocation2 + $0x78] sm:$0xff] %vm296, %v316
        %v321 = vmul.f32 %v288, %v292
        %v322 = vmul.f32 %v289, %v293
        %v323 = vmul.f32 %v290, %v294
        %v324 = vmul.f32 %v291, %v295
        %325 = vst.msk [vmem:[#allocation2 + $0x80] sm:$0xff] %vm296, %v321
        %326 = vst.msk [vmem:[#allocation2 + $0x88] sm:$0xff] %vm296, %v322
        %327 = vst.msk [vmem:[#allocation2 + $0x90] sm:$0xff] %vm296, %v323
        %328 = vst.msk [vmem:[#allocation2 + $0x98] sm:$0xff] %vm296, %v324
        %v329 = vld [vmem:[#allocation2] sm:$0xff]
        %v330 = vld [vmem:[#allocation2 + $0x8] sm:$0xff]
        %v331 = vld [vmem:[#allocation2 + $0x10] sm:$0xff]
        %v332 = vld [vmem:[#allocation2 + $0x18] sm:$0xff]
        %v333 = vld [vmem:[#allocation2 + $0x20] sm:$0xff]
        %v334 = vld [vmem:[#allocation2 + $0x28] sm:$0xff]
        %v335 = vld [vmem:[#allocation2 + $0x30] sm:$0xff]
        %v336 = vld [vmem:[#allocation2 + $0x38] sm:$0xff]
        %v337 = vld [vmem:[#allocation2 + $0x40] sm:$0xff]
        %v338 = vld [vmem:[#allocation2 + $0x48] sm:$0xff]
        %v339 = vld [vmem:[#allocation2 + $0x50] sm:$0xff]
        %v340 = vld [vmem:[#allocation2 + $0x58] sm:$0xff]
        %v341 = vld [vmem:[#allocation2 + $0x60] sm:$0xff]
        %v342 = vld [vmem:[#allocation2 + $0x68] sm:$0xff]
        %v343 = vld [vmem:[#allocation2 + $0x70] sm:$0xff]
        %v344 = vld [vmem:[#allocation2 + $0x78] sm:$0xff]
        %v345 = vld [vmem:[#allocation2 + $0x80] sm:$0xff]
        %v346 = vld [vmem:[#allocation2 + $0x88] sm:$0xff]
        %v347 = vld [vmem:[#allocation2 + $0x90] sm:$0xff]
        %v348 = vld [vmem:[#allocation2 + $0x98] sm:$0xff]
        %v349 = vld [vmem:[#allocation8] sm:$0xff]
        %v350 = vld [vmem:[#allocation8 + $0x8] sm:$0xff]
        %v352 = vsel %vm296, %v329, 0
        %v355 = vsel %vm296, %v330, 0
        %v358 = vsel %vm296, %v331, 0
        %v361 = vsel %vm296, %v332, 0
        %v364 = vsel %vm296, %v333, 0
        %v367 = vsel %vm296, %v334, 0
        %v370 = vsel %vm296, %v335, 0
        %v373 = vsel %vm296, %v336, 0
        %v376 = vsel %vm296, %v337, 0
        %v379 = vsel %vm296, %v338, 0
        %v382 = vsel %vm296, %v339, 0
        %v385 = vsel %vm296, %v340, 0
        %v388 = vsel %vm296, %v341, 0
        %v391 = vsel %vm296, %v342, 0
        %v394 = vsel %vm296, %v343, 0
        %v397 = vsel %vm296, %v344, 0
        %v400 = vsel %vm296, %v345, 0
        %v403 = vsel %vm296, %v346, 0
        %v406 = vsel %vm296, %v347, 0
        %v409 = vsel %vm296, %v348, 0
        %411 = vmatprep.subr.mxu0 0.0
        %412 = vmatpush1.msra.mxu0 0.0
        %413 = vmatprep.subr.mxu0 0.0
        %414 = vmatpush1.msra.mxu0 0.0
        %415 = vmatprep.subr.mxu0 0.0
        %416 = vmatpush1.msra.mxu0 0.0
        %417 = vmatprep.subr.mxu0 0.0
        %418 = vmatpush1.msra.mxu0 0.0
        %419 = vmatprep.subr.mxu0 0.0
        %420 = vmatpush1.msra.mxu0 0.0
        %421 = vmatprep.subr.mxu0 0.0
        %422 = vmatpush1.msra.mxu0 0.0
        %423 = vmatprep.subr.mxu0 0.0
        %424 = vmatpush1.msra.mxu0 0.0
        %425 = vmatprep.subr.mxu0 0.0
        %426 = vmatpush1.msra.mxu0 0.0
        %427 = vmatprep.subr.mxu0 0.0
        %428 = vmatpush1.msra.mxu0 0.0
        %429 = vmatprep.subr.mxu0 0.0
        %430 = vmatpush1.msra.mxu0 0.0
        %431 = vmatprep.subr.mxu0 0.0
        %432 = vmatpush1.msra.mxu0 0.0
        %433 = vmatprep.subr.mxu0 0.0
        %434 = vmatpush1.msra.mxu0 0.0
        %435 = vmatprep.subr.mxu0 0.0
        %436 = vmatpush1.msra.mxu0 0.0
        %437 = vmatprep.subr.mxu0 0.0
        %438 = vmatpush1.msra.mxu0 0.0
        %439 = vmatprep.subr.mxu0 0.0
        %440 = vmatpush1.msra.mxu0 %v350
        %441 = vmatprep.subr.mxu0 0.0
        %442 = vmatpush1.msra.mxu0 %v349
        %443 = vmatprep.subr.mxu0 0.0
        %444 = vmatpush2.msra.mxu0 0.0
        %445 = vmatprep.subr.mxu0 0.0
        %446 = vmatpush2.msra.mxu0 0.0
        %447 = vmatprep.subr.mxu0 0.0
        %448 = vmatpush2.msra.mxu0 0.0
        %449 = vmatprep.subr.mxu0 0.0
        %450 = vmatpush2.msra.mxu0 0.0
        %451 = vmatprep.subr.mxu0 0.0
        %452 = vmatpush2.msra.mxu0 0.0
        %453 = vmatprep.subr.mxu0 0.0
        %454 = vmatpush2.msra.mxu0 0.0
        %455 = vmatprep.subr.mxu0 0.0
        %456 = vmatpush2.msra.mxu0 0.0
        %457 = vmatprep.subr.mxu0 0.0
        %458 = vmatpush2.msra.mxu0 0.0
        %459 = vmatprep.subr.mxu0 0.0
        %460 = vmatpush2.msra.mxu0 0.0
        %461 = vmatprep.subr.mxu0 0.0
        %462 = vmatpush2.msra.mxu0 0.0
        %463 = vmatprep.subr.mxu0 0.0
        %464 = vmatpush2.msra.mxu0 0.0
        %465 = vmatprep.subr.mxu0 0.0
        %466 = vmatpush2.msra.mxu0 0.0
        %467 = vmatprep.subr.mxu0 0.0
        %468 = vmatpush2.msra.mxu0 0.0
        %469 = vmatprep.subr.mxu0 0.0
        %470 = vmatpush2.msra.mxu0 0.0
        %471 = vmatprep.subr.mxu0 0.0
        %472 = vmatpush2.msra.mxu0 0.0
        %473 = vmatprep.subr.mxu0 0.0
        %474 = vmatpush2.msra.mxu0 0.0
        %475 = vmatprep.mubr.f32.mxu0 0.0
        %476 = vmatmul.mubr.f32.gmra.mxu0 %v352
        %v477 = vpop.f32.mrf.mxu0
        %v478 = vadd.f32 0.0, %v477
        %v479 = vpop.f32.mrf.mxu0
        %480 = vmatprep.mubr.f32.mxu0 0.0
        %481 = vmatmul.mubr.f32.gmra.mxu0 %v355
        %v482 = vpop.f32.mrf.mxu0
        %v483 = vadd.f32 0.0, %v482
        %v484 = vpop.f32.mrf.mxu0
        %485 = vmatprep.mubr.f32.mxu0 0.0
        %486 = vmatmul.mubr.f32.gmra.mxu0 %v358
        %v487 = vpop.f32.mrf.mxu0
        %v488 = vadd.f32 0.0, %v487
        %v489 = vpop.f32.mrf.mxu0
        %490 = vmatprep.mubr.f32.mxu0 0.0
        %491 = vmatmul.mubr.f32.gmra.mxu0 %v361
        %v492 = vpop.f32.mrf.mxu0
        %v493 = vadd.f32 0.0, %v492
        %v494 = vpop.f32.mrf.mxu0
        %495 = vmatprep.mubr.f32.mxu0 0.0
        %496 = vmatmul.mubr.f32.gmra.mxu0 %v364
        %v497 = vpop.f32.mrf.mxu0
        %v498 = vadd.f32 0.0, %v497
        %v499 = vpop.f32.mrf.mxu0
        %500 = vmatprep.mubr.f32.mxu0 0.0
        %501 = vmatmul.mubr.f32.gmra.mxu0 %v367
        %v502 = vpop.f32.mrf.mxu0
        %v503 = vadd.f32 0.0, %v502
        %v504 = vpop.f32.mrf.mxu0
        %505 = vmatprep.mubr.f32.mxu0 0.0
        %506 = vmatmul.mubr.f32.gmra.mxu0 %v370
        %v507 = vpop.f32.mrf.mxu0
        %v508 = vadd.f32 0.0, %v507
        %v509 = vpop.f32.mrf.mxu0
        %510 = vmatprep.mubr.f32.mxu0 0.0
        %511 = vmatmul.mubr.f32.gmra.mxu0 %v373
        %v512 = vpop.f32.mrf.mxu0
        %v513 = vadd.f32 0.0, %v512
        %v514 = vpop.f32.mrf.mxu0
        %515 = vmatprep.mubr.f32.mxu0 0.0
        %516 = vmatmul.mubr.f32.gmra.mxu0 %v376
        %v517 = vpop.f32.mrf.mxu0
        %v518 = vadd.f32 0.0, %v517
        %v519 = vpop.f32.mrf.mxu0
        %520 = vmatprep.mubr.f32.mxu0 0.0
        %521 = vmatmul.mubr.f32.gmra.mxu0 %v379
        %v522 = vpop.f32.mrf.mxu0
        %v523 = vadd.f32 0.0, %v522
        %v524 = vpop.f32.mrf.mxu0
        %525 = vmatprep.mubr.f32.mxu0 0.0
        %526 = vmatmul.mubr.f32.gmra.mxu0 %v382
        %v527 = vpop.f32.mrf.mxu0
        %v528 = vadd.f32 0.0, %v527
        %v529 = vpop.f32.mrf.mxu0
        %530 = vmatprep.mubr.f32.mxu0 0.0
        %531 = vmatmul.mubr.f32.gmra.mxu0 %v385
        %v532 = vpop.f32.mrf.mxu0
        %v533 = vadd.f32 0.0, %v532
        %v534 = vpop.f32.mrf.mxu0
        %535 = vmatprep.mubr.f32.mxu0 0.0
        %536 = vmatmul.mubr.f32.gmra.mxu0 %v388
        %v537 = vpop.f32.mrf.mxu0
        %v538 = vadd.f32 0.0, %v537
        %v539 = vpop.f32.mrf.mxu0
        %540 = vmatprep.mubr.f32.mxu0 0.0
        %541 = vmatmul.mubr.f32.gmra.mxu0 %v391
        %v542 = vpop.f32.mrf.mxu0
        %v543 = vadd.f32 0.0, %v542
        %v544 = vpop.f32.mrf.mxu0
        %545 = vmatprep.mubr.f32.mxu0 0.0
        %546 = vmatmul.mubr.f32.gmra.mxu0 %v394
        %v547 = vpop.f32.mrf.mxu0
        %v548 = vadd.f32 0.0, %v547
        %v549 = vpop.f32.mrf.mxu0
        %550 = vmatprep.mubr.f32.mxu0 0.0
        %551 = vmatmul.mubr.f32.gmra.mxu0 %v397
        %v552 = vpop.f32.mrf.mxu0
        %v553 = vadd.f32 0.0, %v552
        %v554 = vpop.f32.mrf.mxu0
        %555 = vmatprep.mubr.f32.mxu0 0.0
        %556 = vmatmul.mubr.f32.gmra.mxu0 %v400
        %v557 = vpop.f32.mrf.mxu0
        %v558 = vadd.f32 0.0, %v557
        %v559 = vpop.f32.mrf.mxu0
        %560 = vmatprep.mubr.f32.mxu0 0.0
        %561 = vmatmul.mubr.f32.gmra.mxu0 %v403
        %v562 = vpop.f32.mrf.mxu0
        %v563 = vadd.f32 0.0, %v562
        %v564 = vpop.f32.mrf.mxu0
        %565 = vmatprep.mubr.f32.mxu0 0.0
        %566 = vmatmul.mubr.f32.gmra.mxu0 %v406
        %v567 = vpop.f32.mrf.mxu0
        %v568 = vadd.f32 0.0, %v567
        %v569 = vpop.f32.mrf.mxu0
        %570 = vmatprep.mubr.f32.mxu0 0.0
        %571 = vmatmul.mubr.f32.gmra.mxu0 %v409
        %v572 = vpop.f32.mrf.mxu0
        %v573 = vadd.f32 0.0, %v572
        %v574 = vpop.f32.mrf.mxu0
        %575 = vdwg.mxu0
        %v576 = vld [vmem:[#allocation9] sm:$0xff]
        %v577 = vld [vmem:[#allocation9 + $0x8] sm:$0xff]
        %v578 = vld [vmem:[#allocation9 + $0x10] sm:$0xff]
        %v579 = vld [vmem:[#allocation9 + $0x18] sm:$0xff]
        %v580 = vld [vmem:[#allocation9 + $0x20] sm:$0xff]
        %v581 = vld [vmem:[#allocation9 + $0x28] sm:$0xff]
        %v582 = vld [vmem:[#allocation9 + $0x30] sm:$0xff]
        %v583 = vld [vmem:[#allocation9 + $0x38] sm:$0xff]
        %v584 = vld [vmem:[#allocation9 + $0x40] sm:$0xff]
        %v585 = vld [vmem:[#allocation9 + $0x48] sm:$0xff]
        %v586 = vld [vmem:[#allocation9 + $0x50] sm:$0xff]
        %v587 = vld [vmem:[#allocation9 + $0x58] sm:$0xff]
        %v588 = vld [vmem:[#allocation9 + $0x60] sm:$0xff]
        %v589 = vld [vmem:[#allocation9 + $0x68] sm:$0xff]
        %v590 = vld [vmem:[#allocation9 + $0x70] sm:$0xff]
        %v591 = vld [vmem:[#allocation9 + $0x78] sm:$0xff]
        %v592 = vld [vmem:[#allocation9 + $0x80] sm:$0xff]
        %v593 = vld [vmem:[#allocation9 + $0x88] sm:$0xff]
        %v594 = vld [vmem:[#allocation9 + $0x90] sm:$0xff]
        %v595 = vld [vmem:[#allocation9 + $0x98] sm:$0xff]
        %v597 = vsel %vm296, %v576, 0
        %v600 = vsel %vm296, %v577, 0
        %602 = vmatprep.subr.mxu0 0.0
        %603 = vmatpush1.msra.mxu0 0.0
        %604 = vmatprep.subr.mxu0 0.0
        %605 = vmatpush1.msra.mxu0 0.0
        %606 = vmatprep.subr.mxu0 0.0
        %607 = vmatpush1.msra.mxu0 0.0
        %608 = vmatprep.subr.mxu0 0.0
        %609 = vmatpush1.msra.mxu0 0.0
        %610 = vmatprep.subr.mxu0 0.0
        %611 = vmatpush1.msra.mxu0 0.0
        %612 = vmatprep.subr.mxu0 0.0
        %613 = vmatpush1.msra.mxu0 0.0
        %614 = vmatprep.subr.mxu0 0.0
        %615 = vmatpush1.msra.mxu0 0.0
        %616 = vmatprep.subr.mxu0 0.0
        %617 = vmatpush1.msra.mxu0 0.0
        %618 = vmatprep.subr.mxu0 0.0
        %619 = vmatpush1.msra.mxu0 0.0
        %620 = vmatprep.subr.mxu0 0.0
        %621 = vmatpush1.msra.mxu0 0.0
        %622 = vmatprep.subr.mxu0 0.0
        %623 = vmatpush1.msra.mxu0 0.0
        %624 = vmatprep.subr.mxu0 0.0
        %625 = vmatpush1.msra.mxu0 0.0
        %626 = vmatprep.subr.mxu0 0.0
        %627 = vmatpush1.msra.mxu0 0.0
        %628 = vmatprep.subr.mxu0 0.0
        %629 = vmatpush1.msra.mxu0 0.0
        %630 = vmatprep.subr.mxu0 0.0
        %631 = vmatpush1.msra.mxu0 %v483
        %632 = vmatprep.subr.mxu0 0.0
        %633 = vmatpush1.msra.mxu0 %v478
        %634 = vmatprep.subr.mxu0 0.0
        %635 = vmatpush2.msra.mxu0 0.0
        %636 = vmatprep.subr.mxu0 0.0
        %637 = vmatpush2.msra.mxu0 0.0
        %638 = vmatprep.subr.mxu0 0.0
        %639 = vmatpush2.msra.mxu0 0.0
        %640 = vmatprep.subr.mxu0 0.0
        %641 = vmatpush2.msra.mxu0 0.0
        %642 = vmatprep.subr.mxu0 0.0
        %643 = vmatpush2.msra.mxu0 0.0
        %644 = vmatprep.subr.mxu0 0.0
        %645 = vmatpush2.msra.mxu0 0.0
        %646 = vmatprep.subr.mxu0 0.0
        %647 = vmatpush2.msra.mxu0 0.0
        %648 = vmatprep.subr.mxu0 0.0
        %649 = vmatpush2.msra.mxu0 0.0
        %650 = vmatprep.subr.mxu0 0.0
        %651 = vmatpush2.msra.mxu0 0.0
        %652 = vmatprep.subr.mxu0 0.0
        %653 = vmatpush2.msra.mxu0 0.0
        %654 = vmatprep.subr.mxu0 0.0
        %655 = vmatpush2.msra.mxu0 0.0
        %656 = vmatprep.subr.mxu0 0.0
        %657 = vmatpush2.msra.mxu0 0.0
        %658 = vmatprep.subr.mxu0 0.0
        %659 = vmatpush2.msra.mxu0 0.0
        %660 = vmatprep.subr.mxu0 0.0
        %661 = vmatpush2.msra.mxu0 0.0
        %662 = vmatprep.subr.mxu0 0.0
        %663 = vmatpush2.msra.mxu0 0.0
        %664 = vmatprep.subr.mxu0 0.0
        %665 = vmatpush2.msra.mxu0 0.0
        %666 = vmatprep.mubr.f32.mxu0 0.0
        %667 = vmatmul.mubr.f32.gmra.mxu0 %v597
        %v668 = vpop.f32.mrf.mxu0
        %v669 = vadd.f32 0.0, %v668
        %v670 = vpop.f32.mrf.mxu0
        %671 = vmatprep.mubr.f32.mxu0 0.0
        %672 = vmatmul.mubr.f32.gmra.mxu0 %v600
        %v673 = vpop.f32.mrf.mxu0
        %v674 = vadd.f32 0.0, %v673
        %v675 = vpop.f32.mrf.mxu0
        %676 = vdwg.mxu0
        %v678 = vsel %vm296, %v578, 0
        %v681 = vsel %vm296, %v579, 0
        %683 = vmatprep.subr.mxu0 0.0
        %684 = vmatpush1.msra.mxu0 0.0
        %685 = vmatprep.subr.mxu0 0.0
        %686 = vmatpush1.msra.mxu0 0.0
        %687 = vmatprep.subr.mxu0 0.0
        %688 = vmatpush1.msra.mxu0 0.0
        %689 = vmatprep.subr.mxu0 0.0
        %690 = vmatpush1.msra.mxu0 0.0
        %691 = vmatprep.subr.mxu0 0.0
        %692 = vmatpush1.msra.mxu0 0.0
        %693 = vmatprep.subr.mxu0 0.0
        %694 = vmatpush1.msra.mxu0 0.0
        %695 = vmatprep.subr.mxu0 0.0
        %696 = vmatpush1.msra.mxu0 0.0
        %697 = vmatprep.subr.mxu0 0.0
        %698 = vmatpush1.msra.mxu0 0.0
        %699 = vmatprep.subr.mxu0 0.0
        %700 = vmatpush1.msra.mxu0 0.0
        %701 = vmatprep.subr.mxu0 0.0
        %702 = vmatpush1.msra.mxu0 0.0
        %703 = vmatprep.subr.mxu0 0.0
        %704 = vmatpush1.msra.mxu0 0.0
        %705 = vmatprep.subr.mxu0 0.0
        %706 = vmatpush1.msra.mxu0 0.0
        %707 = vmatprep.subr.mxu0 0.0
        %708 = vmatpush1.msra.mxu0 0.0
        %709 = vmatprep.subr.mxu0 0.0
        %710 = vmatpush1.msra.mxu0 0.0
        %711 = vmatprep.subr.mxu0 0.0
        %712 = vmatpush1.msra.mxu0 %v493
        %713 = vmatprep.subr.mxu0 0.0
        %714 = vmatpush1.msra.mxu0 %v488
        %715 = vmatprep.subr.mxu0 0.0
        %716 = vmatpush2.msra.mxu0 0.0
        %717 = vmatprep.subr.mxu0 0.0
        %718 = vmatpush2.msra.mxu0 0.0
        %719 = vmatprep.subr.mxu0 0.0
        %720 = vmatpush2.msra.mxu0 0.0
        %721 = vmatprep.subr.mxu0 0.0
        %722 = vmatpush2.msra.mxu0 0.0
        %723 = vmatprep.subr.mxu0 0.0
        %724 = vmatpush2.msra.mxu0 0.0
        %725 = vmatprep.subr.mxu0 0.0
        %726 = vmatpush2.msra.mxu0 0.0
        %727 = vmatprep.subr.mxu0 0.0
        %728 = vmatpush2.msra.mxu0 0.0
        %729 = vmatprep.subr.mxu0 0.0
        %730 = vmatpush2.msra.mxu0 0.0
        %731 = vmatprep.subr.mxu0 0.0
        %732 = vmatpush2.msra.mxu0 0.0
        %733 = vmatprep.subr.mxu0 0.0
        %734 = vmatpush2.msra.mxu0 0.0
        %735 = vmatprep.subr.mxu0 0.0
        %736 = vmatpush2.msra.mxu0 0.0
        %737 = vmatprep.subr.mxu0 0.0
        %738 = vmatpush2.msra.mxu0 0.0
        %739 = vmatprep.subr.mxu0 0.0
        %740 = vmatpush2.msra.mxu0 0.0
        %741 = vmatprep.subr.mxu0 0.0
        %742 = vmatpush2.msra.mxu0 0.0
        %743 = vmatprep.subr.mxu0 0.0
        %744 = vmatpush2.msra.mxu0 0.0
        %745 = vmatprep.subr.mxu0 0.0
        %746 = vmatpush2.msra.mxu0 0.0
        %747 = vmatprep.mubr.f32.mxu0 0.0
        %748 = vmatmul.mubr.f32.gmra.mxu0 %v678
        %v749 = vpop.f32.mrf.mxu0
        %v750 = vadd.f32 0.0, %v749
        %v751 = vpop.f32.mrf.mxu0
        %752 = vmatprep.mubr.f32.mxu0 0.0
        %753 = vmatmul.mubr.f32.gmra.mxu0 %v681
        %v754 = vpop.f32.mrf.mxu0
        %v755 = vadd.f32 0.0, %v754
        %v756 = vpop.f32.mrf.mxu0
        %757 = vdwg.mxu0
        %v759 = vsel %vm296, %v580, 0
        %v762 = vsel %vm296, %v581, 0
        %764 = vmatprep.subr.mxu0 0.0
        %765 = vmatpush1.msra.mxu0 0.0
        %766 = vmatprep.subr.mxu0 0.0
        %767 = vmatpush1.msra.mxu0 0.0
        %768 = vmatprep.subr.mxu0 0.0
        %769 = vmatpush1.msra.mxu0 0.0
        %770 = vmatprep.subr.mxu0 0.0
        %771 = vmatpush1.msra.mxu0 0.0
        %772 = vmatprep.subr.mxu0 0.0
        %773 = vmatpush1.msra.mxu0 0.0
        %774 = vmatprep.subr.mxu0 0.0
        %775 = vmatpush1.msra.mxu0 0.0
        %776 = vmatprep.subr.mxu0 0.0
        %777 = vmatpush1.msra.mxu0 0.0
        %778 = vmatprep.subr.mxu0 0.0
        %779 = vmatpush1.msra.mxu0 0.0
        %780 = vmatprep.subr.mxu0 0.0
        %781 = vmatpush1.msra.mxu0 0.0
        %782 = vmatprep.subr.mxu0 0.0
        %783 = vmatpush1.msra.mxu0 0.0
        %784 = vmatprep.subr.mxu0 0.0
        %785 = vmatpush1.msra.mxu0 0.0
        %786 = vmatprep.subr.mxu0 0.0
        %787 = vmatpush1.msra.mxu0 0.0
        %788 = vmatprep.subr.mxu0 0.0
        %789 = vmatpush1.msra.mxu0 0.0
        %790 = vmatprep.subr.mxu0 0.0
        %791 = vmatpush1.msra.mxu0 0.0
        %792 = vmatprep.subr.mxu0 0.0
        %793 = vmatpush1.msra.mxu0 %v503
        %794 = vmatprep.subr.mxu0 0.0
        %795 = vmatpush1.msra.mxu0 %v498
        %796 = vmatprep.subr.mxu0 0.0
        %797 = vmatpush2.msra.mxu0 0.0
        %798 = vmatprep.subr.mxu0 0.0
        %799 = vmatpush2.msra.mxu0 0.0
        %800 = vmatprep.subr.mxu0 0.0
        %801 = vmatpush2.msra.mxu0 0.0
        %802 = vmatprep.subr.mxu0 0.0
        %803 = vmatpush2.msra.mxu0 0.0
        %804 = vmatprep.subr.mxu0 0.0
        %805 = vmatpush2.msra.mxu0 0.0
        %806 = vmatprep.subr.mxu0 0.0
        %807 = vmatpush2.msra.mxu0 0.0
        %808 = vmatprep.subr.mxu0 0.0
        %809 = vmatpush2.msra.mxu0 0.0
        %810 = vmatprep.subr.mxu0 0.0
        %811 = vmatpush2.msra.mxu0 0.0
        %812 = vmatprep.subr.mxu0 0.0
        %813 = vmatpush2.msra.mxu0 0.0
        %814 = vmatprep.subr.mxu0 0.0
        %815 = vmatpush2.msra.mxu0 0.0
        %816 = vmatprep.subr.mxu0 0.0
        %817 = vmatpush2.msra.mxu0 0.0
        %818 = vmatprep.subr.mxu0 0.0
        %819 = vmatpush2.msra.mxu0 0.0
        %820 = vmatprep.subr.mxu0 0.0
        %821 = vmatpush2.msra.mxu0 0.0
        %822 = vmatprep.subr.mxu0 0.0
        %823 = vmatpush2.msra.mxu0 0.0
        %824 = vmatprep.subr.mxu0 0.0
        %825 = vmatpush2.msra.mxu0 0.0
        %826 = vmatprep.subr.mxu0 0.0
        %827 = vmatpush2.msra.mxu0 0.0
        %828 = vmatprep.mubr.f32.mxu0 0.0
        %829 = vmatmul.mubr.f32.gmra.mxu0 %v759
        %v830 = vpop.f32.mrf.mxu0
        %v831 = vadd.f32 0.0, %v830
        %v832 = vpop.f32.mrf.mxu0
        %833 = vmatprep.mubr.f32.mxu0 0.0
        %834 = vmatmul.mubr.f32.gmra.mxu0 %v762
        %v835 = vpop.f32.mrf.mxu0
        %v836 = vadd.f32 0.0, %v835
        %v837 = vpop.f32.mrf.mxu0
        %838 = vdwg.mxu0
        %v840 = vsel %vm296, %v582, 0
        %v843 = vsel %vm296, %v583, 0
        %845 = vmatprep.subr.mxu0 0.0
        %846 = vmatpush1.msra.mxu0 0.0
        %847 = vmatprep.subr.mxu0 0.0
        %848 = vmatpush1.msra.mxu0 0.0
        %849 = vmatprep.subr.mxu0 0.0
        %850 = vmatpush1.msra.mxu0 0.0
        %851 = vmatprep.subr.mxu0 0.0
        %852 = vmatpush1.msra.mxu0 0.0
        %853 = vmatprep.subr.mxu0 0.0
        %854 = vmatpush1.msra.mxu0 0.0
        %855 = vmatprep.subr.mxu0 0.0
        %856 = vmatpush1.msra.mxu0 0.0
        %857 = vmatprep.subr.mxu0 0.0
        %858 = vmatpush1.msra.mxu0 0.0
        %859 = vmatprep.subr.mxu0 0.0
        %860 = vmatpush1.msra.mxu0 0.0
        %861 = vmatprep.subr.mxu0 0.0
        %862 = vmatpush1.msra.mxu0 0.0
        %863 = vmatprep.subr.mxu0 0.0
        %864 = vmatpush1.msra.mxu0 0.0
        %865 = vmatprep.subr.mxu0 0.0
        %866 = vmatpush1.msra.mxu0 0.0
        %867 = vmatprep.subr.mxu0 0.0
        %868 = vmatpush1.msra.mxu0 0.0
        %869 = vmatprep.subr.mxu0 0.0
        %870 = vmatpush1.msra.mxu0 0.0
        %871 = vmatprep.subr.mxu0 0.0
        %872 = vmatpush1.msra.mxu0 0.0
        %873 = vmatprep.subr.mxu0 0.0
        %874 = vmatpush1.msra.mxu0 %v513
        %875 = vmatprep.subr.mxu0 0.0
        %876 = vmatpush1.msra.mxu0 %v508
        %877 = vmatprep.subr.mxu0 0.0
        %878 = vmatpush2.msra.mxu0 0.0
        %879 = vmatprep.subr.mxu0 0.0
        %880 = vmatpush2.msra.mxu0 0.0
        %881 = vmatprep.subr.mxu0 0.0
        %882 = vmatpush2.msra.mxu0 0.0
        %883 = vmatprep.subr.mxu0 0.0
        %884 = vmatpush2.msra.mxu0 0.0
        %885 = vmatprep.subr.mxu0 0.0
        %886 = vmatpush2.msra.mxu0 0.0
        %887 = vmatprep.subr.mxu0 0.0
        %888 = vmatpush2.msra.mxu0 0.0
        %889 = vmatprep.subr.mxu0 0.0
        %890 = vmatpush2.msra.mxu0 0.0
        %891 = vmatprep.subr.mxu0 0.0
        %892 = vmatpush2.msra.mxu0 0.0
        %893 = vmatprep.subr.mxu0 0.0
        %894 = vmatpush2.msra.mxu0 0.0
        %895 = vmatprep.subr.mxu0 0.0
        %896 = vmatpush2.msra.mxu0 0.0
        %897 = vmatprep.subr.mxu0 0.0
        %898 = vmatpush2.msra.mxu0 0.0
        %899 = vmatprep.subr.mxu0 0.0
        %900 = vmatpush2.msra.mxu0 0.0
        %901 = vmatprep.subr.mxu0 0.0
        %902 = vmatpush2.msra.mxu0 0.0
        %903 = vmatprep.subr.mxu0 0.0
        %904 = vmatpush2.msra.mxu0 0.0
        %905 = vmatprep.subr.mxu0 0.0
        %906 = vmatpush2.msra.mxu0 0.0
        %907 = vmatprep.subr.mxu0 0.0
        %908 = vmatpush2.msra.mxu0 0.0
        %909 = vmatprep.mubr.f32.mxu0 0.0
        %910 = vmatmul.mubr.f32.gmra.mxu0 %v840
        %v911 = vpop.f32.mrf.mxu0
        %v912 = vadd.f32 0.0, %v911
        %v913 = vpop.f32.mrf.mxu0
        %914 = vmatprep.mubr.f32.mxu0 0.0
        %915 = vmatmul.mubr.f32.gmra.mxu0 %v843
        %v916 = vpop.f32.mrf.mxu0
        %v917 = vadd.f32 0.0, %v916
        %v918 = vpop.f32.mrf.mxu0
        %919 = vdwg.mxu0
        %v921 = vsel %vm296, %v584, 0
        %v924 = vsel %vm296, %v585, 0
        %926 = vmatprep.subr.mxu0 0.0
        %927 = vmatpush1.msra.mxu0 0.0
        %928 = vmatprep.subr.mxu0 0.0
        %929 = vmatpush1.msra.mxu0 0.0
        %930 = vmatprep.subr.mxu0 0.0
        %931 = vmatpush1.msra.mxu0 0.0
        %932 = vmatprep.subr.mxu0 0.0
        %933 = vmatpush1.msra.mxu0 0.0
        %934 = vmatprep.subr.mxu0 0.0
        %935 = vmatpush1.msra.mxu0 0.0
        %936 = vmatprep.subr.mxu0 0.0
        %937 = vmatpush1.msra.mxu0 0.0
        %938 = vmatprep.subr.mxu0 0.0
        %939 = vmatpush1.msra.mxu0 0.0
        %940 = vmatprep.subr.mxu0 0.0
        %941 = vmatpush1.msra.mxu0 0.0
        %942 = vmatprep.subr.mxu0 0.0
        %943 = vmatpush1.msra.mxu0 0.0
        %944 = vmatprep.subr.mxu0 0.0
        %945 = vmatpush1.msra.mxu0 0.0
        %946 = vmatprep.subr.mxu0 0.0
        %947 = vmatpush1.msra.mxu0 0.0
        %948 = vmatprep.subr.mxu0 0.0
        %949 = vmatpush1.msra.mxu0 0.0
        %950 = vmatprep.subr.mxu0 0.0
        %951 = vmatpush1.msra.mxu0 0.0
        %952 = vmatprep.subr.mxu0 0.0
        %953 = vmatpush1.msra.mxu0 0.0
        %954 = vmatprep.subr.mxu0 0.0
        %955 = vmatpush1.msra.mxu0 %v523
        %956 = vmatprep.subr.mxu0 0.0
        %957 = vmatpush1.msra.mxu0 %v518
        %958 = vmatprep.subr.mxu0 0.0
        %959 = vmatpush2.msra.mxu0 0.0
        %960 = vmatprep.subr.mxu0 0.0
        %961 = vmatpush2.msra.mxu0 0.0
        %962 = vmatprep.subr.mxu0 0.0
        %963 = vmatpush2.msra.mxu0 0.0
        %964 = vmatprep.subr.mxu0 0.0
        %965 = vmatpush2.msra.mxu0 0.0
        %966 = vmatprep.subr.mxu0 0.0
        %967 = vmatpush2.msra.mxu0 0.0
        %968 = vmatprep.subr.mxu0 0.0
        %969 = vmatpush2.msra.mxu0 0.0
        %970 = vmatprep.subr.mxu0 0.0
        %971 = vmatpush2.msra.mxu0 0.0
        %972 = vmatprep.subr.mxu0 0.0
        %973 = vmatpush2.msra.mxu0 0.0
        %974 = vmatprep.subr.mxu0 0.0
        %975 = vmatpush2.msra.mxu0 0.0
        %976 = vmatprep.subr.mxu0 0.0
        %977 = vmatpush2.msra.mxu0 0.0
        %978 = vmatprep.subr.mxu0 0.0
        %979 = vmatpush2.msra.mxu0 0.0
        %980 = vmatprep.subr.mxu0 0.0
        %981 = vmatpush2.msra.mxu0 0.0
        %982 = vmatprep.subr.mxu0 0.0
        %983 = vmatpush2.msra.mxu0 0.0
        %984 = vmatprep.subr.mxu0 0.0
        %985 = vmatpush2.msra.mxu0 0.0
        %986 = vmatprep.subr.mxu0 0.0
        %987 = vmatpush2.msra.mxu0 0.0
        %988 = vmatprep.subr.mxu0 0.0
        %989 = vmatpush2.msra.mxu0 0.0
        %990 = vmatprep.mubr.f32.mxu0 0.0
        %991 = vmatmul.mubr.f32.gmra.mxu0 %v921
        %v992 = vpop.f32.mrf.mxu0
        %v993 = vadd.f32 0.0, %v992
        %v994 = vpop.f32.mrf.mxu0
        %995 = vmatprep.mubr.f32.mxu0 0.0
        %996 = vmatmul.mubr.f32.gmra.mxu0 %v924
        %v997 = vpop.f32.mrf.mxu0
        %v998 = vadd.f32 0.0, %v997
        %v999 = vpop.f32.mrf.mxu0
        %1000 = vdwg.mxu0
        %v1002 = vsel %vm296, %v586, 0
        %v1005 = vsel %vm296, %v587, 0
        %1007 = vmatprep.subr.mxu0 0.0
        %1008 = vmatpush1.msra.mxu0 0.0
        %1009 = vmatprep.subr.mxu0 0.0
        %1010 = vmatpush1.msra.mxu0 0.0
        %1011 = vmatprep.subr.mxu0 0.0
        %1012 = vmatpush1.msra.mxu0 0.0
        %1013 = vmatprep.subr.mxu0 0.0
        %1014 = vmatpush1.msra.mxu0 0.0
        %1015 = vmatprep.subr.mxu0 0.0
        %1016 = vmatpush1.msra.mxu0 0.0
        %1017 = vmatprep.subr.mxu0 0.0
        %1018 = vmatpush1.msra.mxu0 0.0
        %1019 = vmatprep.subr.mxu0 0.0
        %1020 = vmatpush1.msra.mxu0 0.0
        %1021 = vmatprep.subr.mxu0 0.0
        %1022 = vmatpush1.msra.mxu0 0.0
        %1023 = vmatprep.subr.mxu0 0.0
        %1024 = vmatpush1.msra.mxu0 0.0
        %1025 = vmatprep.subr.mxu0 0.0
        %1026 = vmatpush1.msra.mxu0 0.0
        %1027 = vmatprep.subr.mxu0 0.0
        %1028 = vmatpush1.msra.mxu0 0.0
        %1029 = vmatprep.subr.mxu0 0.0
        %1030 = vmatpush1.msra.mxu0 0.0
        %1031 = vmatprep.subr.mxu0 0.0
        %1032 = vmatpush1.msra.mxu0 0.0
        %1033 = vmatprep.subr.mxu0 0.0
        %1034 = vmatpush1.msra.mxu0 0.0
        %1035 = vmatprep.subr.mxu0 0.0
        %1036 = vmatpush1.msra.mxu0 %v533
        %1037 = vmatprep.subr.mxu0 0.0
        %1038 = vmatpush1.msra.mxu0 %v528
        %1039 = vmatprep.subr.mxu0 0.0
        %1040 = vmatpush2.msra.mxu0 0.0
        %1041 = vmatprep.subr.mxu0 0.0
        %1042 = vmatpush2.msra.mxu0 0.0
        %1043 = vmatprep.subr.mxu0 0.0
        %1044 = vmatpush2.msra.mxu0 0.0
        %1045 = vmatprep.subr.mxu0 0.0
        %1046 = vmatpush2.msra.mxu0 0.0
        %1047 = vmatprep.subr.mxu0 0.0
        %1048 = vmatpush2.msra.mxu0 0.0
        %1049 = vmatprep.subr.mxu0 0.0
        %1050 = vmatpush2.msra.mxu0 0.0
        %1051 = vmatprep.subr.mxu0 0.0
        %1052 = vmatpush2.msra.mxu0 0.0
        %1053 = vmatprep.subr.mxu0 0.0
        %1054 = vmatpush2.msra.mxu0 0.0
        %1055 = vmatprep.subr.mxu0 0.0
        %1056 = vmatpush2.msra.mxu0 0.0
        %1057 = vmatprep.subr.mxu0 0.0
        %1058 = vmatpush2.msra.mxu0 0.0
        %1059 = vmatprep.subr.mxu0 0.0
        %1060 = vmatpush2.msra.mxu0 0.0
        %1061 = vmatprep.subr.mxu0 0.0
        %1062 = vmatpush2.msra.mxu0 0.0
        %1063 = vmatprep.subr.mxu0 0.0
        %1064 = vmatpush2.msra.mxu0 0.0
        %1065 = vmatprep.subr.mxu0 0.0
        %1066 = vmatpush2.msra.mxu0 0.0
        %1067 = vmatprep.subr.mxu0 0.0
        %1068 = vmatpush2.msra.mxu0 0.0
        %1069 = vmatprep.subr.mxu0 0.0
        %1070 = vmatpush2.msra.mxu0 0.0
        %1071 = vmatprep.mubr.f32.mxu0 0.0
        %1072 = vmatmul.mubr.f32.gmra.mxu0 %v1002
        %v1073 = vpop.f32.mrf.mxu0
        %v1074 = vadd.f32 0.0, %v1073
        %v1075 = vpop.f32.mrf.mxu0
        %1076 = vmatprep.mubr.f32.mxu0 0.0
        %1077 = vmatmul.mubr.f32.gmra.mxu0 %v1005
        %v1078 = vpop.f32.mrf.mxu0
        %v1079 = vadd.f32 0.0, %v1078
        %v1080 = vpop.f32.mrf.mxu0
        %1081 = vdwg.mxu0
        %v1083 = vsel %vm296, %v588, 0
        %v1086 = vsel %vm296, %v589, 0
        %1088 = vmatprep.subr.mxu0 0.0
        %1089 = vmatpush1.msra.mxu0 0.0
        %1090 = vmatprep.subr.mxu0 0.0
        %1091 = vmatpush1.msra.mxu0 0.0
        %1092 = vmatprep.subr.mxu0 0.0
        %1093 = vmatpush1.msra.mxu0 0.0
        %1094 = vmatprep.subr.mxu0 0.0
        %1095 = vmatpush1.msra.mxu0 0.0
        %1096 = vmatprep.subr.mxu0 0.0
        %1097 = vmatpush1.msra.mxu0 0.0
        %1098 = vmatprep.subr.mxu0 0.0
        %1099 = vmatpush1.msra.mxu0 0.0
        %1100 = vmatprep.subr.mxu0 0.0
        %1101 = vmatpush1.msra.mxu0 0.0
        %1102 = vmatprep.subr.mxu0 0.0
        %1103 = vmatpush1.msra.mxu0 0.0
        %1104 = vmatprep.subr.mxu0 0.0
        %1105 = vmatpush1.msra.mxu0 0.0
        %1106 = vmatprep.subr.mxu0 0.0
        %1107 = vmatpush1.msra.mxu0 0.0
        %1108 = vmatprep.subr.mxu0 0.0
        %1109 = vmatpush1.msra.mxu0 0.0
        %1110 = vmatprep.subr.mxu0 0.0
        %1111 = vmatpush1.msra.mxu0 0.0
        %1112 = vmatprep.subr.mxu0 0.0
        %1113 = vmatpush1.msra.mxu0 0.0
        %1114 = vmatprep.subr.mxu0 0.0
        %1115 = vmatpush1.msra.mxu0 0.0
        %1116 = vmatprep.subr.mxu0 0.0
        %1117 = vmatpush1.msra.mxu0 %v543
        %1118 = vmatprep.subr.mxu0 0.0
        %1119 = vmatpush1.msra.mxu0 %v538
        %1120 = vmatprep.subr.mxu0 0.0
        %1121 = vmatpush2.msra.mxu0 0.0
        %1122 = vmatprep.subr.mxu0 0.0
        %1123 = vmatpush2.msra.mxu0 0.0
        %1124 = vmatprep.subr.mxu0 0.0
        %1125 = vmatpush2.msra.mxu0 0.0
        %1126 = vmatprep.subr.mxu0 0.0
        %1127 = vmatpush2.msra.mxu0 0.0
        %1128 = vmatprep.subr.mxu0 0.0
        %1129 = vmatpush2.msra.mxu0 0.0
        %1130 = vmatprep.subr.mxu0 0.0
        %1131 = vmatpush2.msra.mxu0 0.0
        %1132 = vmatprep.subr.mxu0 0.0
        %1133 = vmatpush2.msra.mxu0 0.0
        %1134 = vmatprep.subr.mxu0 0.0
        %1135 = vmatpush2.msra.mxu0 0.0
        %1136 = vmatprep.subr.mxu0 0.0
        %1137 = vmatpush2.msra.mxu0 0.0
        %1138 = vmatprep.subr.mxu0 0.0
        %1139 = vmatpush2.msra.mxu0 0.0
        %1140 = vmatprep.subr.mxu0 0.0
        %1141 = vmatpush2.msra.mxu0 0.0
        %1142 = vmatprep.subr.mxu0 0.0
        %1143 = vmatpush2.msra.mxu0 0.0
        %1144 = vmatprep.subr.mxu0 0.0
        %1145 = vmatpush2.msra.mxu0 0.0
        %1146 = vmatprep.subr.mxu0 0.0
        %1147 = vmatpush2.msra.mxu0 0.0
        %1148 = vmatprep.subr.mxu0 0.0
        %1149 = vmatpush2.msra.mxu0 0.0
        %1150 = vmatprep.subr.mxu0 0.0
        %1151 = vmatpush2.msra.mxu0 0.0
        %1152 = vmatprep.mubr.f32.mxu0 0.0
        %1153 = vmatmul.mubr.f32.gmra.mxu0 %v1083
        %v1154 = vpop.f32.mrf.mxu0
        %v1155 = vadd.f32 0.0, %v1154
        %v1156 = vpop.f32.mrf.mxu0
        %1157 = vmatprep.mubr.f32.mxu0 0.0
        %1158 = vmatmul.mubr.f32.gmra.mxu0 %v1086
        %v1159 = vpop.f32.mrf.mxu0
        %v1160 = vadd.f32 0.0, %v1159
        %v1161 = vpop.f32.mrf.mxu0
        %1162 = vdwg.mxu0
        %v1164 = vsel %vm296, %v590, 0
        %v1167 = vsel %vm296, %v591, 0
        %1169 = vmatprep.subr.mxu0 0.0
        %1170 = vmatpush1.msra.mxu0 0.0
        %1171 = vmatprep.subr.mxu0 0.0
        %1172 = vmatpush1.msra.mxu0 0.0
        %1173 = vmatprep.subr.mxu0 0.0
        %1174 = vmatpush1.msra.mxu0 0.0
        %1175 = vmatprep.subr.mxu0 0.0
        %1176 = vmatpush1.msra.mxu0 0.0
        %1177 = vmatprep.subr.mxu0 0.0
        %1178 = vmatpush1.msra.mxu0 0.0
        %1179 = vmatprep.subr.mxu0 0.0
        %1180 = vmatpush1.msra.mxu0 0.0
        %1181 = vmatprep.subr.mxu0 0.0
        %1182 = vmatpush1.msra.mxu0 0.0
        %1183 = vmatprep.subr.mxu0 0.0
        %1184 = vmatpush1.msra.mxu0 0.0
        %1185 = vmatprep.subr.mxu0 0.0
        %1186 = vmatpush1.msra.mxu0 0.0
        %1187 = vmatprep.subr.mxu0 0.0
        %1188 = vmatpush1.msra.mxu0 0.0
        %1189 = vmatprep.subr.mxu0 0.0
        %1190 = vmatpush1.msra.mxu0 0.0
        %1191 = vmatprep.subr.mxu0 0.0
        %1192 = vmatpush1.msra.mxu0 0.0
        %1193 = vmatprep.subr.mxu0 0.0
        %1194 = vmatpush1.msra.mxu0 0.0
        %1195 = vmatprep.subr.mxu0 0.0
        %1196 = vmatpush1.msra.mxu0 0.0
        %1197 = vmatprep.subr.mxu0 0.0
        %1198 = vmatpush1.msra.mxu0 %v553
        %1199 = vmatprep.subr.mxu0 0.0
        %1200 = vmatpush1.msra.mxu0 %v548
        %1201 = vmatprep.subr.mxu0 0.0
        %1202 = vmatpush2.msra.mxu0 0.0
        %1203 = vmatprep.subr.mxu0 0.0
        %1204 = vmatpush2.msra.mxu0 0.0
        %1205 = vmatprep.subr.mxu0 0.0
        %1206 = vmatpush2.msra.mxu0 0.0
        %1207 = vmatprep.subr.mxu0 0.0
        %1208 = vmatpush2.msra.mxu0 0.0
        %1209 = vmatprep.subr.mxu0 0.0
        %1210 = vmatpush2.msra.mxu0 0.0
        %1211 = vmatprep.subr.mxu0 0.0
        %1212 = vmatpush2.msra.mxu0 0.0
        %1213 = vmatprep.subr.mxu0 0.0
        %1214 = vmatpush2.msra.mxu0 0.0
        %1215 = vmatprep.subr.mxu0 0.0
        %1216 = vmatpush2.msra.mxu0 0.0
        %1217 = vmatprep.subr.mxu0 0.0
        %1218 = vmatpush2.msra.mxu0 0.0
        %1219 = vmatprep.subr.mxu0 0.0
        %1220 = vmatpush2.msra.mxu0 0.0
        %1221 = vmatprep.subr.mxu0 0.0
        %1222 = vmatpush2.msra.mxu0 0.0
        %1223 = vmatprep.subr.mxu0 0.0
        %1224 = vmatpush2.msra.mxu0 0.0
        %1225 = vmatprep.subr.mxu0 0.0
        %1226 = vmatpush2.msra.mxu0 0.0
        %1227 = vmatprep.subr.mxu0 0.0
        %1228 = vmatpush2.msra.mxu0 0.0
        %1229 = vmatprep.subr.mxu0 0.0
        %1230 = vmatpush2.msra.mxu0 0.0
        %1231 = vmatprep.subr.mxu0 0.0
        %1232 = vmatpush2.msra.mxu0 0.0
        %1233 = vmatprep.mubr.f32.mxu0 0.0
        %1234 = vmatmul.mubr.f32.gmra.mxu0 %v1164
        %v1235 = vpop.f32.mrf.mxu0
        %v1236 = vadd.f32 0.0, %v1235
        %v1237 = vpop.f32.mrf.mxu0
        %1238 = vmatprep.mubr.f32.mxu0 0.0
        %1239 = vmatmul.mubr.f32.gmra.mxu0 %v1167
        %v1240 = vpop.f32.mrf.mxu0
        %v1241 = vadd.f32 0.0, %v1240
        %v1242 = vpop.f32.mrf.mxu0
        %1243 = vdwg.mxu0
        %v1245 = vsel %vm296, %v592, 0
        %v1248 = vsel %vm296, %v593, 0
        %1250 = vmatprep.subr.mxu0 0.0
        %1251 = vmatpush1.msra.mxu0 0.0
        %1252 = vmatprep.subr.mxu0 0.0
        %1253 = vmatpush1.msra.mxu0 0.0
        %1254 = vmatprep.subr.mxu0 0.0
        %1255 = vmatpush1.msra.mxu0 0.0
        %1256 = vmatprep.subr.mxu0 0.0
        %1257 = vmatpush1.msra.mxu0 0.0
        %1258 = vmatprep.subr.mxu0 0.0
        %1259 = vmatpush1.msra.mxu0 0.0
        %1260 = vmatprep.subr.mxu0 0.0
        %1261 = vmatpush1.msra.mxu0 0.0
        %1262 = vmatprep.subr.mxu0 0.0
        %1263 = vmatpush1.msra.mxu0 0.0
        %1264 = vmatprep.subr.mxu0 0.0
        %1265 = vmatpush1.msra.mxu0 0.0
        %1266 = vmatprep.subr.mxu0 0.0
        %1267 = vmatpush1.msra.mxu0 0.0
        %1268 = vmatprep.subr.mxu0 0.0
        %1269 = vmatpush1.msra.mxu0 0.0
        %1270 = vmatprep.subr.mxu0 0.0
        %1271 = vmatpush1.msra.mxu0 0.0
        %1272 = vmatprep.subr.mxu0 0.0
        %1273 = vmatpush1.msra.mxu0 0.0
        %1274 = vmatprep.subr.mxu0 0.0
        %1275 = vmatpush1.msra.mxu0 0.0
        %1276 = vmatprep.subr.mxu0 0.0
        %1277 = vmatpush1.msra.mxu0 0.0
        %1278 = vmatprep.subr.mxu0 0.0
        %1279 = vmatpush1.msra.mxu0 %v563
        %1280 = vmatprep.subr.mxu0 0.0
        %1281 = vmatpush1.msra.mxu0 %v558
        %1282 = vmatprep.subr.mxu0 0.0
        %1283 = vmatpush2.msra.mxu0 0.0
        %1284 = vmatprep.subr.mxu0 0.0
        %1285 = vmatpush2.msra.mxu0 0.0
        %1286 = vmatprep.subr.mxu0 0.0
        %1287 = vmatpush2.msra.mxu0 0.0
        %1288 = vmatprep.subr.mxu0 0.0
        %1289 = vmatpush2.msra.mxu0 0.0
        %1290 = vmatprep.subr.mxu0 0.0
        %1291 = vmatpush2.msra.mxu0 0.0
        %1292 = vmatprep.subr.mxu0 0.0
        %1293 = vmatpush2.msra.mxu0 0.0
        %1294 = vmatprep.subr.mxu0 0.0
        %1295 = vmatpush2.msra.mxu0 0.0
        %1296 = vmatprep.subr.mxu0 0.0
        %1297 = vmatpush2.msra.mxu0 0.0
        %1298 = vmatprep.subr.mxu0 0.0
        %1299 = vmatpush2.msra.mxu0 0.0
        %1300 = vmatprep.subr.mxu0 0.0
        %1301 = vmatpush2.msra.mxu0 0.0
        %1302 = vmatprep.subr.mxu0 0.0
        %1303 = vmatpush2.msra.mxu0 0.0
        %1304 = vmatprep.subr.mxu0 0.0
        %1305 = vmatpush2.msra.mxu0 0.0
        %1306 = vmatprep.subr.mxu0 0.0
        %1307 = vmatpush2.msra.mxu0 0.0
        %1308 = vmatprep.subr.mxu0 0.0
        %1309 = vmatpush2.msra.mxu0 0.0
        %1310 = vmatprep.subr.mxu0 0.0
        %1311 = vmatpush2.msra.mxu0 0.0
        %1312 = vmatprep.subr.mxu0 0.0
        %1313 = vmatpush2.msra.mxu0 0.0
        %1314 = vmatprep.mubr.f32.mxu0 0.0
        %1315 = vmatmul.mubr.f32.gmra.mxu0 %v1245
        %v1316 = vpop.f32.mrf.mxu0
        %v1317 = vadd.f32 0.0, %v1316
        %v1318 = vpop.f32.mrf.mxu0
        %1319 = vmatprep.mubr.f32.mxu0 0.0
        %1320 = vmatmul.mubr.f32.gmra.mxu0 %v1248
        %v1321 = vpop.f32.mrf.mxu0
        %v1322 = vadd.f32 0.0, %v1321
        %v1323 = vpop.f32.mrf.mxu0
        %1324 = vdwg.mxu0
        %v1326 = vsel %vm296, %v594, 0
        %v1329 = vsel %vm296, %v595, 0
        %1331 = vmatprep.subr.mxu0 0.0
        %1332 = vmatpush1.msra.mxu0 0.0
        %1333 = vmatprep.subr.mxu0 0.0
        %1334 = vmatpush1.msra.mxu0 0.0
        %1335 = vmatprep.subr.mxu0 0.0
        %1336 = vmatpush1.msra.mxu0 0.0
        %1337 = vmatprep.subr.mxu0 0.0
        %1338 = vmatpush1.msra.mxu0 0.0
        %1339 = vmatprep.subr.mxu0 0.0
        %1340 = vmatpush1.msra.mxu0 0.0
        %1341 = vmatprep.subr.mxu0 0.0
        %1342 = vmatpush1.msra.mxu0 0.0
        %1343 = vmatprep.subr.mxu0 0.0
        %1344 = vmatpush1.msra.mxu0 0.0
        %1345 = vmatprep.subr.mxu0 0.0
        %1346 = vmatpush1.msra.mxu0 0.0
        %1347 = vmatprep.subr.mxu0 0.0
        %1348 = vmatpush1.msra.mxu0 0.0
        %1349 = vmatprep.subr.mxu0 0.0
        %1350 = vmatpush1.msra.mxu0 0.0
        %1351 = vmatprep.subr.mxu0 0.0
        %1352 = vmatpush1.msra.mxu0 0.0
        %1353 = vmatprep.subr.mxu0 0.0
        %1354 = vmatpush1.msra.mxu0 0.0
        %1355 = vmatprep.subr.mxu0 0.0
        %1356 = vmatpush1.msra.mxu0 0.0
        %1357 = vmatprep.subr.mxu0 0.0
        %1358 = vmatpush1.msra.mxu0 0.0
        %1359 = vmatprep.subr.mxu0 0.0
        %1360 = vmatpush1.msra.mxu0 %v573
        %1361 = vmatprep.subr.mxu0 0.0
        %1362 = vmatpush1.msra.mxu0 %v568
        %1363 = vmatprep.subr.mxu0 0.0
        %1364 = vmatpush2.msra.mxu0 0.0
        %1365 = vmatprep.subr.mxu0 0.0
        %1366 = vmatpush2.msra.mxu0 0.0
        %1367 = vmatprep.subr.mxu0 0.0
        %1368 = vmatpush2.msra.mxu0 0.0
        %1369 = vmatprep.subr.mxu0 0.0
        %1370 = vmatpush2.msra.mxu0 0.0
        %1371 = vmatprep.subr.mxu0 0.0
        %1372 = vmatpush2.msra.mxu0 0.0
        %1373 = vmatprep.subr.mxu0 0.0
        %1374 = vmatpush2.msra.mxu0 0.0
        %1375 = vmatprep.subr.mxu0 0.0
        %1376 = vmatpush2.msra.mxu0 0.0
        %1377 = vmatprep.subr.mxu0 0.0
        %1378 = vmatpush2.msra.mxu0 0.0
        %1379 = vmatprep.subr.mxu0 0.0
        %1380 = vmatpush2.msra.mxu0 0.0
        %1381 = vmatprep.subr.mxu0 0.0
        %1382 = vmatpush2.msra.mxu0 0.0
        %1383 = vmatprep.subr.mxu0 0.0
        %1384 = vmatpush2.msra.mxu0 0.0
        %1385 = vmatprep.subr.mxu0 0.0
        %1386 = vmatpush2.msra.mxu0 0.0
        %1387 = vmatprep.subr.mxu0 0.0
        %1388 = vmatpush2.msra.mxu0 0.0
        %1389 = vmatprep.subr.mxu0 0.0
        %1390 = vmatpush2.msra.mxu0 0.0
        %1391 = vmatprep.subr.mxu0 0.0
        %1392 = vmatpush2.msra.mxu0 0.0
        %1393 = vmatprep.subr.mxu0 0.0
        %1394 = vmatpush2.msra.mxu0 0.0
        %1395 = vmatprep.mubr.f32.mxu0 0.0
        %1396 = vmatmul.mubr.f32.gmra.mxu0 %v1326
        %v1397 = vpop.f32.mrf.mxu0
        %v1398 = vadd.f32 0.0, %v1397
        %v1399 = vpop.f32.mrf.mxu0
        %1400 = vmatprep.mubr.f32.mxu0 0.0
        %1401 = vmatmul.mubr.f32.gmra.mxu0 %v1329
        %v1402 = vpop.f32.mrf.mxu0
        %v1403 = vadd.f32 0.0, %v1402
        %v1404 = vpop.f32.mrf.mxu0
        %1405 = vdwg.mxu0
        %v1406 = vmul.f32 %v669, %v669
        %v1407 = vmul.f32 %v674, %v674
        %v1408 = vmul.f32 %v750, %v750
        %v1409 = vmul.f32 %v755, %v755
        %v1410 = vmul.f32 %v831, %v831
        %v1411 = vmul.f32 %v836, %v836
        %v1412 = vmul.f32 %v912, %v912
        %v1413 = vmul.f32 %v917, %v917
        %v1414 = vmul.f32 %v669, %v831
        %v1415 = vmul.f32 %v674, %v836
        %v1416 = vmul.f32 %v750, %v912
        %v1417 = vmul.f32 %v755, %v917
        %v1418 = vsub.f32 %v993, %v1406
        %v1419 = vsub.f32 %v998, %v1407
        %v1420 = vsub.f32 %v1074, %v1408
        %v1421 = vsub.f32 %v1079, %v1409
        %v1422 = vsub.f32 %v1155, %v1410
        %v1423 = vsub.f32 %v1160, %v1411
        %v1424 = vsub.f32 %v1236, %v1412
        %v1425 = vsub.f32 %v1241, %v1413
        %v1426 = vsub.f32 %v1317, %v1414
        %v1427 = vsub.f32 %v1322, %v1415
        %v1428 = vsub.f32 %v1398, %v1416
        %v1429 = vsub.f32 %v1403, %v1417
        %v1430 = vmul.f32 %v1414, 2.0
        %v1431 = vmul.f32 %v1415, 2.0
        %v1432 = vmul.f32 %v1416, 2.0
        %v1433 = vmul.f32 %v1417, 2.0
        %v1434 = vadd.f32 %v1430, 0.0001
        %v1435 = vadd.f32 %v1431, 0.0001
        %v1436 = vadd.f32 %v1432, 0.0001
        %v1437 = vadd.f32 %v1433, 0.0001
        %v1438 = vmul.f32 %v1426, 2.0
        %v1439 = vmul.f32 %v1427, 2.0
        %v1440 = vmul.f32 %v1428, 2.0
        %v1441 = vmul.f32 %v1429, 2.0
        %v1442 = vadd.f32 %v1438, 0.0009
        %v1443 = vadd.f32 %v1439, 0.0009
        %v1444 = vadd.f32 %v1440, 0.0009
        %v1445 = vadd.f32 %v1441, 0.0009
        %v1446 = vmul.f32 %v1434, %v1442
        %v1447 = vmul.f32 %v1435, %v1443
        %v1448 = vmul.f32 %v1436, %v1444
        %v1449 = vmul.f32 %v1437, %v1445
        %v1450 = vadd.f32 %v1406, %v1410
        %v1451 = vadd.f32 %v1407, %v1411
        %v1452 = vadd.f32 %v1408, %v1412
        %v1453 = vadd.f32 %v1409, %v1413
        %v1454 = vadd.f32 %v1450, 0.0001
        %v1455 = vadd.f32 %v1451, 0.0001
        %v1456 = vadd.f32 %v1452, 0.0001
        %v1457 = vadd.f32 %v1453, 0.0001
        %v1458 = vadd.f32 %v1418, %v1422
        %v1459 = vadd.f32 %v1419, %v1423
        %v1460 = vadd.f32 %v1420, %v1424
        %v1461 = vadd.f32 %v1421, %v1425
        %v1462 = vadd.f32 %v1458, 0.0009
        %v1463 = vadd.f32 %v1459, 0.0009
        %v1464 = vadd.f32 %v1460, 0.0009
        %v1465 = vadd.f32 %v1461, 0.0009
        %v1466 = vmul.f32 %v1454, %v1462
        %v1467 = vmul.f32 %v1455, %v1463
        %v1468 = vmul.f32 %v1456, %v1464
        %v1469 = vmul.f32 %v1457, %v1465
        %v1470 = vrcp.pop %v1466
        %v1471 = vrcp.pop %v1467
        %v1472 = vrcp.pop %v1468
        %v1473 = vrcp.pop %v1469
        %v1474 = vmul.f32 %v1466, %v1470
        %v1475 = vmul.f32 %v1467, %v1471
        %v1476 = vmul.f32 %v1468, %v1472
        %v1477 = vmul.f32 %v1469, %v1473
        %v1478 = vsub.f32 2.0, %v1474
        %v1479 = vsub.f32 2.0, %v1475
        %v1480 = vsub.f32 2.0, %v1476
        %v1481 = vsub.f32 2.0, %v1477
        %v1482 = vmul.f32 %v1470, %v1478
        %v1483 = vmul.f32 %v1471, %v1479
        %v1484 = vmul.f32 %v1472, %v1480
        %v1485 = vmul.f32 %v1473, %v1481
        %v1486 = vmul.f32 %v1446, %v1482
        %v1487 = vmul.f32 %v1447, %v1483
        %v1488 = vmul.f32 %v1448, %v1484
        %v1489 = vmul.f32 %v1449, %v1485
        %v1490 = vadd.f32 %v1486, %v1488
        %v1491 = vadd.f32 %v1487, %v1489
        %v1492 = vadd.f32 %v1490, %v1491
        %v1493 = vrot.slane %v1492, 4
        %v1494 = vadd.f32 %v1492, %v1493
        %v1495 = vrot.slane %v1494, 2
        %v1496 = vadd.f32 %v1494, %v1495
        %v1497 = vrot.slane %v1496, 1
        %v1498 = vadd.f32 %v1496, %v1497
        %1499 = vst [vmem:[%s285] sm:$0x1] %v1498
        %s1500 = sand.u32 %s127, 1
        %s1501 = scalar_lea.sflag [#allocation5], %s1500
        %s1502 = sand.u32 %s127, 1
        %s1503 = scalar_lea.vmem [#allocation11], %s1502
        // Predicated region
        $region53: #{tpu_custom_call.1} parent=35 // pred_check
          %p1504 = pneg %p137
        $region54: #{tpu_custom_call.1} parent=35 // pred_check_branch
          %1506 = sbr.rel (%p1504) target = $region56
        $region55: #{tpu_custom_call.1} parent=35 // pred_region
          %s1508 = ssub.s32 16, 16
          %1509 = vsyncadd %s1501, %s1508
          %s1510 = smul.addr %s25, 16
          %s1511 = scalar_lea.hbm %s4, %s1510
          %s1513 = sshll.u32 %s1503, 4
          %s1514 = int_to_ptr.vmem [resolvable:$true] %s1513
          %1516 = dma.vmem_to_hbm [thread:$0]  %s1514, 16, %s1511, %s1501
        $region56: #{tpu_custom_call.1} parent=35 // pred_fallthru
          _
      $region36: #{tpu_custom_call.1} parent=5 // pred_fallthru
        _
      %p1517 = scmp.le.s32.totalorder 2, %s20
      // Predicated region
      $region57: #{tpu_custom_call.1} parent=5 // pred_check
        %p1518 = pneg %p1517
      $region58: #{tpu_custom_call.1} parent=5 // pred_check_branch
        %1520 = sbr.rel (%p1518) target = $region60
      $region59: #{tpu_custom_call.1} parent=5 // pred_region
        %s1521 = ssub.s32 %s20, 2
        // Predicated region
        $region61: #{tpu_custom_call.1} parent=59 // pred_check
          %p1522 = pneg %p143
        $region62: #{tpu_custom_call.1} parent=59 // pred_check_branch
          %1524 = sbr.rel (%p1522) target = $region64
        $region63: #{tpu_custom_call.1} parent=59 // pred_region
          %s1525 = sand.u32 %s128, 1
          %s1526 = scalar_lea.sflag [#allocation5], %s1525
          %s1527 = sand.u32 %s128, 1
          %s1528 = scalar_lea.vmem [#allocation11], %s1527
          %1529 = dma.done %s1526, 16
        $region64: #{tpu_custom_call.1} parent=59 // pred_fallthru
          _
      $region60: #{tpu_custom_call.1} parent=5 // pred_fallthru
        _
    $region6: #{tpu_custom_call.1} parent=1 // loop_footer
      %s24 = sadd.s32 1, %s20
    $region7: #{tpu_custom_call.1} parent=1 // loop_footer_branch
      %19 = sbr.rel target = $region3
    $region8: #{tpu_custom_call.1} parent=1 // loop_exit
      _
    %1530 = vsyncpa [#allocation4], 1
    %s1531 = scalar_lea.sflag [#allocation4], 1
    %1532 = vsyncpa %s1531, 1
    %1533 = vsyncpa [#allocation7], 1
    %s1534 = scalar_lea.sflag [#allocation7], 1
    %1535 = vsyncpa %s1534, 1
    %1536 = vsyncpa [#allocation10], 1
    %1537 = vsyncpa [#allocation5], 1
    %s1538 = scalar_lea.sflag [#allocation5], 1
    %1539 = vsyncpa %s1538, 1

</llo_original>
